<compile_context>
chip_gen: v6e
topology: v6e:2x2x1
jax: 0.10.0
libtpu: 0.0.40
codegen_flags: <defaults>
</compile_context>

<pallas_src>
import functools

import jax
import jax.numpy as jnp
from jax.experimental import pallas as pl
from jax.experimental.pallas import tpu as pltpu


def _cin_kernel(x_ref, *refs, layer_size, emb_dim, tb, fused,
                out_row_offsets, compute_dtype, z_chunk_elems):
    """Fused CIN forward for one batch tile.

    x_ref : [F, D*tb] f32, lane index = d * tb + b_local  (d-major layout)
    per fused / final layer   : w [S, C] (compute dtype), b [S, 1] f32
    per split non-final layer : w_h, b_h, w_d, b_d (halves pre-split)
    out_ref : [out_dim_padded, tb] f32
    """
    out_ref = refs[-1]
    params = refs[:-1]

    x0 = x_ref[...].astype(jnp.float32)          # [F, N], N = D * tb
    n_fields = x0.shape[0]
    n_lanes = x0.shape[1]
    hidden = x0

    def conv_chunked(w_list, hidden):
        """K-chunked 1x1-conv matmuls sharing each outer-product z chunk."""
        n_hidden = hidden.shape[0]
        h_chunk = max(1, z_chunk_elems // max(1, n_fields * n_lanes))
        h_chunk = max(8, (h_chunk // 8) * 8)     # sublane-aligned chunks
        outs = [None] * len(w_list)
        for c0 in range(0, n_hidden, h_chunk):
            c1 = min(c0 + h_chunk, n_hidden)
            hc = hidden[c0:c1]                                   # [hc, N] f32
            # Outer product in f32 on the VPU; cast only at the MXU operand.
            zc = (hc[:, None, :] * x0[None, :, :]).reshape(
                (c1 - c0) * n_fields, n_lanes).astype(compute_dtype)
            cs, ce = c0 * n_fields, c1 * n_fields
            for j, w in enumerate(w_list):
                part = jnp.dot(w[:, cs:ce], zc,
                               preferred_element_type=jnp.float32)
                outs[j] = part if outs[j] is None else outs[j] + part
        return outs

    pieces = []
    p = 0
    last = len(layer_size) - 1
    for i, size in enumerate(layer_size):
        if i != last and not fused[i]:
            # Fallback: S/2 not sublane aligned -> pre-split weights, two
            # matmuls sharing each z chunk.
            w_h, b_h, w_d, b_d = (r[...] for r in params[p:p + 4])
            p += 4
            y_h, y_d = conv_chunked([w_h, w_d], hidden)
            hidden = jnp.maximum(y_h + b_h, 0.0)                 # next hidden
            direct = jnp.maximum(y_d + b_d, 0.0)                 # direct connect
        else:
            w, b = (r[...] for r in params[p:p + 2])
            p += 2
            (y,) = conv_chunked([w], hidden)
            y = jnp.maximum(y + b, 0.0)                          # [S, N] f32
            if i != last:
                half = size // 2                                 # multiple of 8
                hidden = y[:half]
                direct = y[half:]
            else:
                direct = y

        # Sum over the embedding dim: D-1 full-lane VPU adds; lane offsets are
        # multiples of tb (>= 128) so every slice is vreg aligned.
        acc = direct[:, 0:tb]
        for d in range(1, emb_dim):
            acc = acc + direct[:, d * tb:(d + 1) * tb]
        pieces.append(acc)                                       # [rows, tb] f32

    # One store per piece; offsets are padded to multiples of 8 in the wrapper
    # so stores never share an (8,128) tile (no masked RMW interplay).
    for acc, row0 in zip(pieces, out_row_offsets):
        out_ref[row0:row0 + acc.shape[0], :] = acc


def cin_forward(x, weights, biases, layer_size, *, tb=256,
                compute_dtype=jnp.bfloat16, z_chunk_elems=1 << 18,
                vmem_limit_bytes=None):
    """x: [B, F, D] f32; weights[i]: [S_i, H_{i-1}*F]; biases[i]: [S_i]."""
    B, F, D = x.shape
    layer_size = tuple(int(s) for s in layer_size)
    out_dim = sum(layer_size[:-1]) // 2 + layer_size[-1]

    # Batch tile: kernel lanes are (d * tb + b_local); tb a multiple of 128
    # keeps every per-d slab vreg aligned.  Prefer >= 2 grid steps (keeps both
    # v7x TensorCores busy) without over-padding small batches.
    tb = max(128, (tb // 128) * 128)
    tb = min(tb, max(128, ((B + 127) // 128) * 128))
    if B > 128:
        tb = min(tb, max(128, (((B + 1) // 2) + 127) // 128 * 128))
    b_pad = ((B + tb - 1) // tb) * tb
    n_steps = b_pad // tb
    if b_pad != B:
        x = jnp.pad(x, ((0, b_pad - B), (0, 0), (0, 0)))

    # d-major lane layout: x_steps[i, f, d*tb + b] = x[i*tb + b, f, d].
    # TODO(synk): a producer emitting x already as [F, D, B] would remove this
    # single extra XLA transpose pass over x.
    x_steps = (x.astype(jnp.float32)
                .reshape(n_steps, tb, F, D)
                .transpose(0, 2, 3, 1)
                .reshape(n_steps, F, D * tb))

    params = []
    in_specs = [pl.BlockSpec((None, F, D * tb), lambda i: (i, 0, 0))]

    def add_param(arr):
        params.append(arr)
        in_specs.append(
            pl.BlockSpec(arr.shape, lambda i, _nd=arr.ndim: (0,) * _nd))

    fused = []
    out_row_offsets = []
    piece_rows = []
    row = 0
    last = len(layer_size) - 1
    for i, (w, b, size) in enumerate(zip(weights, biases, layer_size)):
        w = jnp.asarray(w, jnp.float32).astype(compute_dtype)
        b2 = jnp.asarray(b, jnp.float32).reshape(-1, 1)
        if i != last:
            half = size // 2
            if half % 8 == 0:
                fused.append(True)           # one matmul, split the f32 result
                add_param(w); add_param(b2)
            else:
                fused.append(False)          # tiny-S fallback: pre-split weights
                add_param(w[:half]); add_param(b2[:half])
                add_param(w[half:]); add_param(b2[half:])
            rows = size - half
        else:
            add_param(w); add_param(b2)
            rows = size
        row0 = ((row + 7) // 8) * 8          # sublane-align each output piece
        out_row_offsets.append(row0)
        piece_rows.append(rows)
        row = row0 + rows
    out_dim_padded = row

    # Advisory cost estimate (no selector matmul, halves fused).
    flops = 0
    chans = F
    for size in layer_size:
        cin = chans * F
        flops += 2 * size * cin * D * b_pad       # conv matmuls
        flops += cin * D * b_pad                  # outer product
        chans = size // 2
    flops += out_dim * (D - 1) * b_pad            # embedding-dim VPU reduction
    bytes_accessed = (x_steps.size * 4
                      + sum(int(p.size) * p.dtype.itemsize for p in params)
                      + out_dim_padded * b_pad * 4)

    kernel = functools.partial(
        _cin_kernel, layer_size=layer_size, emb_dim=D, tb=tb,
        fused=tuple(fused), out_row_offsets=tuple(out_row_offsets),
        compute_dtype=compute_dtype, z_chunk_elems=int(z_chunk_elems))

    cp_kwargs = dict(dimension_semantics=("parallel",))
    if vmem_limit_bytes is not None:
        cp_kwargs["vmem_limit_bytes"] = int(vmem_limit_bytes)

    out_t = pl.pallas_call(
        kernel,
        out_shape=jax.ShapeDtypeStruct((out_dim_padded, b_pad), jnp.float32),
        grid=(n_steps,),
        in_specs=in_specs,
        out_specs=pl.BlockSpec((out_dim_padded, tb), lambda i: (0, i)),
        compiler_params=pltpu.CompilerParams(**cp_kwargs),
        cost_estimate=pl.CostEstimate(flops=int(flops), transcendentals=0,
                                      bytes_accessed=int(bytes_accessed)),
    )(x_steps, *params)

    if out_dim_padded != out_dim:    # compact the sublane-padded pieces
        out_t = jnp.concatenate(
            [out_t[o:o + r] for o, r in zip(out_row_offsets, piece_rows)],
            axis=0)
    return jnp.transpose(out_t)[:B]               # [B, out_dim]


def cin_apply(x, weights, biases, layer_size, **kw):
    """Handles arbitrary leading dims like the PyTorch module ([*, F, D])."""
    leading = x.shape[:-2]
    F, D = x.shape[-2:]
    out = cin_forward(x.reshape((-1, F, D)), weights, biases, layer_size, **kw)
    return out.reshape(leading + (out.shape[-1],))


def cin_ref(x, weights, biases, layer_size):
    """Pure-JAX reference mirroring the PyTorch forward."""
    bs, F, D = x.shape
    hidden = x
    finals = []
    prec = jax.lax.Precision.HIGHEST
    for i, size in enumerate(layer_size):
        z = jnp.einsum('bhd,bmd->bhmd', hidden, x, precision=prec).reshape(
            bs, hidden.shape[1] * F, D)
        y = jnp.einsum('sc,bcd->bsd', weights[i], z,
                       precision=prec) + biases[i][None, :, None]
        y = jnp.maximum(y, 0.0)
        if i != len(layer_size) - 1:
            hidden = y[:, :size // 2]
            finals.append(y[:, size // 2:])
        else:
            finals.append(y)
    return jnp.concatenate(finals, axis=1).sum(-1)


if __name__ == "__main__":
    B, F, D = 256, 4, 16
    key = jax.random.PRNGKey(0)
    kx, kp = jax.random.split(key)
    x = jax.random.normal(kx, (B, F, D), dtype=jnp.float32)

    def make_params(layer_size, pkey):
        field_nums = [F]
        ws, bs = [], []
        ks = jax.random.split(pkey, 2 * len(layer_size))
        for i, size in enumerate(layer_size):
            cin = field_nums[-1] * field_nums[0]
            ws.append(0.1 * jax.random.normal(ks[2 * i], (size, cin), jnp.float32))
            bs.append(0.1 * jax.random.normal(ks[2 * i + 1], (size,), jnp.float32))
            field_nums.append(size // 2)
        return ws, bs

    # Case 1: aligned halves -> fused per-layer matmul path, no output padding.
    ls1 = (16, 8)                      # out_dim = 16//2 + 8 = 16
    w1, b1 = make_params(ls1, jax.random.fold_in(kp, 1))
    ref1 = cin_ref(x, w1, b1, ls1)
    out1_f32 = jax.block_until_ready(
        cin_apply(x, w1, b1, ls1, compute_dtype=jnp.float32))
    assert out1_f32.shape == (B, 16)
    assert jnp.allclose(out1_f32, ref1, rtol=1e-3, atol=1e-3)
    out1_bf16 = jax.block_until_ready(cin_apply(x, w1, b1, ls1))   # bf16 default
    assert out1_bf16.shape == (B, 16)
    assert jnp.allclose(out1_bf16, ref1, rtol=5e-2, atol=5e-2)

    # Case 2: tiny unaligned halves -> split-weight fallback + output compaction.
    ls2 = (8, 8)                       # out_dim = 8//2 + 8 = 12
    w2, b2 = make_params(ls2, jax.random.fold_in(kp, 2))
    ref2 = cin_ref(x, w2, b2, ls2)
    out2_f32 = jax.block_until_ready(
        cin_apply(x, w2, b2, ls2, compute_dtype=jnp.float32))
    assert out2_f32.shape == (B, 12)
    assert jnp.allclose(out2_f32, ref2, rtol=1e-3, atol=1e-3)
    out2_bf16 = jax.block_until_ready(cin_apply(x, w2, b2, ls2))
    assert out2_bf16.shape == (B, 12)
    assert jnp.allclose(out2_bf16, ref2, rtol=5e-2, atol=5e-2)

    print("KERNEL_OK")
</pallas_src>

<mosaic_0001>
module attributes {stable_mosaic.version = 11 : i64} {
  func.func @_cin_kernel(%arg0: i32, %arg1: memref<1x4x2048xf32, #tpu.memory_space<vmem>>, %arg2: memref<16x16xf32, #tpu.memory_space<vmem>>, %arg3: memref<16x1xf32, #tpu.memory_space<vmem>>, %arg4: memref<8x32xf32, #tpu.memory_space<vmem>>, %arg5: memref<8x1xf32, #tpu.memory_space<vmem>>, %arg6: memref<16x128xf32, #tpu.memory_space<vmem>>) attributes {dimension_semantics = [#tpu.dimension_semantics<parallel>], iteration_bounds = array<i64: 2>, scalar_prefetch = 0 : i64, scratch_operands = 0 : i64, tpu.core_type = #tpu.core_type<tc>, window_params = [{transform_indices = @transform_0, window_bounds = array<i64: 1, 4, 2048>}, {pipeline_mode = #tpu.pipeline_mode<synchronous>, transform_indices = @transform_1, window_bounds = array<i64: 16, 16>}, {pipeline_mode = #tpu.pipeline_mode<synchronous>, transform_indices = @transform_2, window_bounds = array<i64: 16, 1>}, {pipeline_mode = #tpu.pipeline_mode<synchronous>, transform_indices = @transform_3, window_bounds = array<i64: 8, 32>}, {pipeline_mode = #tpu.pipeline_mode<synchronous>, transform_indices = @transform_4, window_bounds = array<i64: 8, 1>}, {transform_indices = @transform_5, window_bounds = array<i64: 16, 128>}]} {
    %c0 = arith.constant 0 : index
    %c0_0 = arith.constant 0 : index
    %c0_1 = arith.constant 0 : index
    %0 = vector.load %arg1[%c0, %c0_0, %c0_1] : memref<1x4x2048xf32, #tpu.memory_space<vmem>>, vector<1x4x2048xf32>
    %1 = vector.shape_cast %0 : vector<1x4x2048xf32> to vector<4x2048xf32>
    %c0_2 = arith.constant 0 : index
    %c0_3 = arith.constant 0 : index
    %2 = vector.load %arg2[%c0_2, %c0_3] : memref<16x16xf32, #tpu.memory_space<vmem>>, vector<16x16xf32>
    %c0_4 = arith.constant 0 : index
    %c0_5 = arith.constant 0 : index
    %3 = vector.load %arg3[%c0_4, %c0_5] : memref<16x1xf32, #tpu.memory_space<vmem>>, vector<16x1xf32>
    %4 = vector.shape_cast %1 : vector<4x2048xf32> to vector<4x1x2048xf32>
    %5 = vector.shape_cast %1 : vector<4x2048xf32> to vector<1x4x2048xf32>
    %6 = vector.broadcast %4 : vector<4x1x2048xf32> to vector<4x4x2048xf32>
    %7 = vector.broadcast %5 : vector<1x4x2048xf32> to vector<4x4x2048xf32>
    %8 = arith.mulf %6, %7 : vector<4x4x2048xf32>
    %9 = vector.shape_cast %8 : vector<4x4x2048xf32> to vector<16x2048xf32>
    %cst = arith.constant dense<0.000000e+00> : vector<16x2048xf32>
    %10 = tpu.matmul %2, %9, %cst {dimension_numbers = #tpu.dot_dimension_numbers<[1], [0], [0], [1], [0, 0, 1, 1], [], []>} : vector<16x16xf32>, vector<16x2048xf32>, vector<16x2048xf32> -> vector<16x2048xf32>
    %11 = vector.broadcast %3 : vector<16x1xf32> to vector<16x2048xf32>
    %12 = arith.addf %10, %11 : vector<16x2048xf32>
    %cst_6 = arith.constant 0.000000e+00 : f32
    %13 = vector.broadcast %cst_6 : f32 to vector<16x2048xf32>
    %14 = arith.maximumf %12, %13 : vector<16x2048xf32>
    %15 = vector.extract_strided_slice %14 {offsets = [0, 0], sizes = [8, 2048], strides = [1, 1]} : vector<16x2048xf32> to vector<8x2048xf32>
    %16 = vector.extract_strided_slice %14 {offsets = [8, 0], sizes = [8, 2048], strides = [1, 1]} : vector<16x2048xf32> to vector<8x2048xf32>
    %17 = vector.extract_strided_slice %16 {offsets = [0, 0], sizes = [8, 128], strides = [1, 1]} : vector<8x2048xf32> to vector<8x128xf32>
    %18 = vector.extract_strided_slice %16 {offsets = [0, 128], sizes = [8, 128], strides = [1, 1]} : vector<8x2048xf32> to vector<8x128xf32>
    %19 = arith.addf %17, %18 : vector<8x128xf32>
    %20 = vector.extract_strided_slice %16 {offsets = [0, 256], sizes = [8, 128], strides = [1, 1]} : vector<8x2048xf32> to vector<8x128xf32>
    %21 = arith.addf %19, %20 : vector<8x128xf32>
    %22 = vector.extract_strided_slice %16 {offsets = [0, 384], sizes = [8, 128], strides = [1, 1]} : vector<8x2048xf32> to vector<8x128xf32>
    %23 = arith.addf %21, %22 : vector<8x128xf32>
    %24 = vector.extract_strided_slice %16 {offsets = [0, 512], sizes = [8, 128], strides = [1, 1]} : vector<8x2048xf32> to vector<8x128xf32>
    %25 = arith.addf %23, %24 : vector<8x128xf32>
    %26 = vector.extract_strided_slice %16 {offsets = [0, 640], sizes = [8, 128], strides = [1, 1]} : vector<8x2048xf32> to vector<8x128xf32>
    %27 = arith.addf %25, %26 : vector<8x128xf32>
    %28 = vector.extract_strided_slice %16 {offsets = [0, 768], sizes = [8, 128], strides = [1, 1]} : vector<8x2048xf32> to vector<8x128xf32>
    %29 = arith.addf %27, %28 : vector<8x128xf32>
    %30 = vector.extract_strided_slice %16 {offsets = [0, 896], sizes = [8, 128], strides = [1, 1]} : vector<8x2048xf32> to vector<8x128xf32>
    %31 = arith.addf %29, %30 : vector<8x128xf32>
    %32 = vector.extract_strided_slice %16 {offsets = [0, 1024], sizes = [8, 128], strides = [1, 1]} : vector<8x2048xf32> to vector<8x128xf32>
    %33 = arith.addf %31, %32 : vector<8x128xf32>
    %34 = vector.extract_strided_slice %16 {offsets = [0, 1152], sizes = [8, 128], strides = [1, 1]} : vector<8x2048xf32> to vector<8x128xf32>
    %35 = arith.addf %33, %34 : vector<8x128xf32>
    %36 = vector.extract_strided_slice %16 {offsets = [0, 1280], sizes = [8, 128], strides = [1, 1]} : vector<8x2048xf32> to vector<8x128xf32>
    %37 = arith.addf %35, %36 : vector<8x128xf32>
    %38 = vector.extract_strided_slice %16 {offsets = [0, 1408], sizes = [8, 128], strides = [1, 1]} : vector<8x2048xf32> to vector<8x128xf32>
    %39 = arith.addf %37, %38 : vector<8x128xf32>
    %40 = vector.extract_strided_slice %16 {offsets = [0, 1536], sizes = [8, 128], strides = [1, 1]} : vector<8x2048xf32> to vector<8x128xf32>
    %41 = arith.addf %39, %40 : vector<8x128xf32>
    %42 = vector.extract_strided_slice %16 {offsets = [0, 1664], sizes = [8, 128], strides = [1, 1]} : vector<8x2048xf32> to vector<8x128xf32>
    %43 = arith.addf %41, %42 : vector<8x128xf32>
    %44 = vector.extract_strided_slice %16 {offsets = [0, 1792], sizes = [8, 128], strides = [1, 1]} : vector<8x2048xf32> to vector<8x128xf32>
    %45 = arith.addf %43, %44 : vector<8x128xf32>
    %46 = vector.extract_strided_slice %16 {offsets = [0, 1920], sizes = [8, 128], strides = [1, 1]} : vector<8x2048xf32> to vector<8x128xf32>
    %47 = arith.addf %45, %46 : vector<8x128xf32>
    %c0_7 = arith.constant 0 : index
    %c0_8 = arith.constant 0 : index
    %48 = vector.load %arg4[%c0_7, %c0_8] : memref<8x32xf32, #tpu.memory_space<vmem>>, vector<8x32xf32>
    %c0_9 = arith.constant 0 : index
    %c0_10 = arith.constant 0 : index
    %49 = vector.load %arg5[%c0_9, %c0_10] : memref<8x1xf32, #tpu.memory_space<vmem>>, vector<8x1xf32>
    %50 = vector.shape_cast %15 : vector<8x2048xf32> to vector<8x1x2048xf32>
    %51 = vector.shape_cast %1 : vector<4x2048xf32> to vector<1x4x2048xf32>
    %52 = vector.broadcast %50 : vector<8x1x2048xf32> to vector<8x4x2048xf32>
    %53 = vector.broadcast %51 : vector<1x4x2048xf32> to vector<8x4x2048xf32>
    %54 = arith.mulf %52, %53 : vector<8x4x2048xf32>
    %55 = vector.shape_cast %54 : vector<8x4x2048xf32> to vector<32x2048xf32>
    %cst_11 = arith.constant dense<0.000000e+00> : vector<8x2048xf32>
    %56 = tpu.matmul %48, %55, %cst_11 {dimension_numbers = #tpu.dot_dimension_numbers<[1], [0], [0], [1], [0, 0, 1, 1], [], []>} : vector<8x32xf32>, vector<32x2048xf32>, vector<8x2048xf32> -> vector<8x2048xf32>
    %57 = vector.broadcast %49 : vector<8x1xf32> to vector<8x2048xf32>
    %58 = arith.addf %56, %57 : vector<8x2048xf32>
    %cst_12 = arith.constant 0.000000e+00 : f32
    %59 = vector.broadcast %cst_12 : f32 to vector<8x2048xf32>
    %60 = arith.maximumf %58, %59 : vector<8x2048xf32>
    %61 = vector.extract_strided_slice %60 {offsets = [0, 0], sizes = [8, 128], strides = [1, 1]} : vector<8x2048xf32> to vector<8x128xf32>
    %62 = vector.extract_strided_slice %60 {offsets = [0, 128], sizes = [8, 128], strides = [1, 1]} : vector<8x2048xf32> to vector<8x128xf32>
    %63 = arith.addf %61, %62 : vector<8x128xf32>
    %64 = vector.extract_strided_slice %60 {offsets = [0, 256], sizes = [8, 128], strides = [1, 1]} : vector<8x2048xf32> to vector<8x128xf32>
    %65 = arith.addf %63, %64 : vector<8x128xf32>
    %66 = vector.extract_strided_slice %60 {offsets = [0, 384], sizes = [8, 128], strides = [1, 1]} : vector<8x2048xf32> to vector<8x128xf32>
    %67 = arith.addf %65, %66 : vector<8x128xf32>
    %68 = vector.extract_strided_slice %60 {offsets = [0, 512], sizes = [8, 128], strides = [1, 1]} : vector<8x2048xf32> to vector<8x128xf32>
    %69 = arith.addf %67, %68 : vector<8x128xf32>
    %70 = vector.extract_strided_slice %60 {offsets = [0, 640], sizes = [8, 128], strides = [1, 1]} : vector<8x2048xf32> to vector<8x128xf32>
    %71 = arith.addf %69, %70 : vector<8x128xf32>
    %72 = vector.extract_strided_slice %60 {offsets = [0, 768], sizes = [8, 128], strides = [1, 1]} : vector<8x2048xf32> to vector<8x128xf32>
    %73 = arith.addf %71, %72 : vector<8x128xf32>
    %74 = vector.extract_strided_slice %60 {offsets = [0, 896], sizes = [8, 128], strides = [1, 1]} : vector<8x2048xf32> to vector<8x128xf32>
    %75 = arith.addf %73, %74 : vector<8x128xf32>
    %76 = vector.extract_strided_slice %60 {offsets = [0, 1024], sizes = [8, 128], strides = [1, 1]} : vector<8x2048xf32> to vector<8x128xf32>
    %77 = arith.addf %75, %76 : vector<8x128xf32>
    %78 = vector.extract_strided_slice %60 {offsets = [0, 1152], sizes = [8, 128], strides = [1, 1]} : vector<8x2048xf32> to vector<8x128xf32>
    %79 = arith.addf %77, %78 : vector<8x128xf32>
    %80 = vector.extract_strided_slice %60 {offsets = [0, 1280], sizes = [8, 128], strides = [1, 1]} : vector<8x2048xf32> to vector<8x128xf32>
    %81 = arith.addf %79, %80 : vector<8x128xf32>
    %82 = vector.extract_strided_slice %60 {offsets = [0, 1408], sizes = [8, 128], strides = [1, 1]} : vector<8x2048xf32> to vector<8x128xf32>
    %83 = arith.addf %81, %82 : vector<8x128xf32>
    %84 = vector.extract_strided_slice %60 {offsets = [0, 1536], sizes = [8, 128], strides = [1, 1]} : vector<8x2048xf32> to vector<8x128xf32>
    %85 = arith.addf %83, %84 : vector<8x128xf32>
    %86 = vector.extract_strided_slice %60 {offsets = [0, 1664], sizes = [8, 128], strides = [1, 1]} : vector<8x2048xf32> to vector<8x128xf32>
    %87 = arith.addf %85, %86 : vector<8x128xf32>
    %88 = vector.extract_strided_slice %60 {offsets = [0, 1792], sizes = [8, 128], strides = [1, 1]} : vector<8x2048xf32> to vector<8x128xf32>
    %89 = arith.addf %87, %88 : vector<8x128xf32>
    %90 = vector.extract_strided_slice %60 {offsets = [0, 1920], sizes = [8, 128], strides = [1, 1]} : vector<8x2048xf32> to vector<8x128xf32>
    %91 = arith.addf %89, %90 : vector<8x128xf32>
    %c0_13 = arith.constant 0 : index
    %c0_14 = arith.constant 0 : index
    %92 = vector.load %arg6[%c0_13, %c0_14] : memref<16x128xf32, #tpu.memory_space<vmem>>, vector<8x128xf32>
    tpu.vector_store %arg6[%c0_13, %c0_14], %47 {strides = array<i32>} : memref<16x128xf32, #tpu.memory_space<vmem>>, vector<8x128xf32>,
    %c8 = arith.constant 8 : index
    %c0_15 = arith.constant 0 : index
    %93 = vector.load %arg6[%c8, %c0_15] : memref<16x128xf32, #tpu.memory_space<vmem>>, vector<8x128xf32>
    tpu.vector_store %arg6[%c8, %c0_15], %91 {strides = array<i32>} : memref<16x128xf32, #tpu.memory_space<vmem>>, vector<8x128xf32>,
    return
  }
  func.func @transform_0(%arg0: i32) -> (i32, i32, i32) {
    %c0_i32 = arith.constant 0 : i32
    %c0_i32_0 = arith.constant 0 : i32
    %c0_i32_1 = arith.constant 0 : i32
    return %arg0, %c0_i32, %c0_i32_0 : i32, i32, i32
  }
  func.func @transform_1(%arg0: i32) -> (i32, i32) {
    %c0_i32 = arith.constant 0 : i32
    %c0_i32_0 = arith.constant 0 : i32
    %c0_i32_1 = arith.constant 0 : i32
    return %c0_i32, %c0_i32_0 : i32, i32
  }
  func.func @transform_2(%arg0: i32) -> (i32, i32) {
    %c0_i32 = arith.constant 0 : i32
    %c0_i32_0 = arith.constant 0 : i32
    %c0_i32_1 = arith.constant 0 : i32
    return %c0_i32, %c0_i32_0 : i32, i32
  }
  func.func @transform_3(%arg0: i32) -> (i32, i32) {
    %c0_i32 = arith.constant 0 : i32
    %c0_i32_0 = arith.constant 0 : i32
    %c0_i32_1 = arith.constant 0 : i32
    return %c0_i32, %c0_i32_0 : i32, i32
  }
  func.func @transform_4(%arg0: i32) -> (i32, i32) {
    %c0_i32 = arith.constant 0 : i32
    %c0_i32_0 = arith.constant 0 : i32
    %c0_i32_1 = arith.constant 0 : i32
    return %c0_i32, %c0_i32_0 : i32, i32
  }
  func.func @transform_5(%arg0: i32) -> (i32, i32) {
    %c0_i32 = arith.constant 0 : i32
    %c0_i32_0 = arith.constant 0 : i32
    return %c0_i32, %arg0 : i32, i32
  }
}

</mosaic_0001>

<llo_original>
// kernel: tpu_custom_call.1
$region0: #{tpu_custom_call.1}
  #allocation0 [shape = 'u32[]', space=smem, size = 0x4, offset = 0x4, fixed_abs, tag = 'smem constant byte address 0x4 - core index']
  #allocation1 [shape = 'u32[144,128]{1,0:T(1,128)}', space=vmem, size = 0x12000, scoped, tag = 'internal scratch']
  %s0 = inlined_call_operand.hbm [shape: f32[2,4,2048], index: 0, kind: input, shape index: {}]
  %s1 = inlined_call_operand.vmem [shape: f32[16,16], index: 1, kind: input, shape index: {}]
  %s2 = inlined_call_operand.vmem [shape: f32[16,1], index: 2, kind: input, shape index: {}]
  %s3 = inlined_call_operand.vmem [shape: f32[8,32], index: 3, kind: input, shape index: {}]
  %s4 = inlined_call_operand.vmem [shape: f32[8,1], index: 4, kind: input, shape index: {}]
  %s5 = inlined_call_operand.hbm [shape: f32[16,256], index: 5, kind: output, shape index: {}]
  %s6 = sld [smem:[#allocation0]]
  $region57: #{tpu_custom_call.1} parent=0
    _
  %s8 = ssub.s32 1, %s6
  %s9 = scalar_select 0, %s8, %s6
  $region1: #{tpu_custom_call.1} parent=0
    #allocation2 [shape = 'u8[65536]{0}', space=vmem, size = 0x10000, scoped, tag = 'input window, operand 0']
    #allocation3 [shape = 's32[2]{0}', space=sflag, size = 0x8, scoped, tag = 'scoped memory for tpu_custom_call.1']
    #allocation4 [shape = 's32[2]{0}', space=sflag, size = 0x8, scoped, tag = 'scoped memory for tpu_custom_call.1']
    #allocation5 [shape = 'u8[16384]{0}', space=vmem, size = 0x4000, scoped, tag = 'output window, operand 0']
    %10 = vsyncpa [#allocation3], 0
    %s11 = scalar_lea.sflag [#allocation3], 1
    %12 = vsyncpa %s11, 0
    %13 = vsyncpa [#allocation4], 0
    %s14 = scalar_lea.sflag [#allocation4], 1
    %15 = vsyncpa %s14, 0
    loop: start=0, step=1, limit=4
    $region2: #{tpu_custom_call.1} parent=1 // loop_pre_header
      _
    $region3: #{tpu_custom_call.1} parent=1 // loop_header
      %s17 = sphi 0, %s21
      %p18 = scmp.ge.s32.totalorder %s17, 4
      %s27 = sphi 0, %s29
      %s30 = sphi 0, %s27
      %s31 = sphi 0, %s30
      %s47 = sphi 0, %s31
      %s51 = sphi 0, %s51
      %s53 = sphi 0, %s51
      %s54 = sphi 0, %s53
      %s68 = sphi 0, %s54
      %s72 = sphi 0, %s72
      %s74 = sphi 0, %s72
      %s75 = sphi 0, %s74
      %s89 = sphi 0, %s75
      %s93 = sphi 0, %s93
      %s95 = sphi 0, %s93
      %s96 = sphi 0, %s95
      %s110 = sphi 0, %s96
      %s114 = sphi 0, %s114
      %s116 = sphi 0, %s114
      %s117 = sphi 0, %s116
      %s131 = sphi 0, %s117
      %s137 = sphi 0, %s139
      %s140 = sphi 0, %s137
      %s141 = sphi 0, %s140
      %s157 = sphi 0, %s141
    $region4: #{tpu_custom_call.1} parent=1 // loop_header_branch
      %20 = sbr.rel (%p18) target = $region8
    $region5: #{tpu_custom_call.1} parent=1 // loop_body
      %s22 = ssub.s32 %s17, 1
      %s23 = ssub.s32 %s17, 2
      %s24 = sadd.s32 %s17, 1
      %s25 = ssub.s32 %s17, %s24
      %p26 = scmp.eq.s32.totalorder %s25, 0
      %s28 = sadd.s32 %s27, 1
      %s29 = scalar_select %p26, %s27, %s28
      %p32 = pneg %p26
      %p33 = scmp.eq.s32.totalorder %s17, 1
      %p34 = por %p32, %p33
      %p35 = scmp.ne.s32.totalorder %s27, %s30
      %p36 = scmp.eq.s32.totalorder %s17, 0
      %p37 = por %p35, %p36
      %p38 = scmp.ne.s32.totalorder %s27, %s30
      %p39 = scmp.eq.s32.totalorder %s22, 1
      %p40 = por %p38, %p39
      %p41 = scmp.ne.s32.totalorder %s30, %s31
      %p42 = scmp.eq.s32.totalorder %s22, 0
      %p43 = por %p41, %p42
      %p44 = scmp.ne.s32.totalorder %s30, %s31
      %p45 = scmp.eq.s32.totalorder %s23, 1
      %p46 = por %p44, %p45
      %p48 = scmp.ne.s32.totalorder %s31, %s47
      %p49 = scmp.eq.s32.totalorder %s23, 0
      %p50 = por %p48, %p49
      %s52 = sadd.s32 %s51, 1
      %p55 = scmp.eq.s32.totalorder %s17, 1
      %p56 = scmp.ne.s32.totalorder %s51, %s53
      %p57 = scmp.eq.s32.totalorder %s17, 0
      %p58 = por %p56, %p57
      %p59 = scmp.ne.s32.totalorder %s51, %s53
      %p60 = scmp.eq.s32.totalorder %s22, 1
      %p61 = por %p59, %p60
      %p62 = scmp.ne.s32.totalorder %s53, %s54
      %p63 = scmp.eq.s32.totalorder %s22, 0
      %p64 = por %p62, %p63
      %p65 = scmp.ne.s32.totalorder %s53, %s54
      %p66 = scmp.eq.s32.totalorder %s23, 1
      %p67 = por %p65, %p66
      %p69 = scmp.ne.s32.totalorder %s54, %s68
      %p70 = scmp.eq.s32.totalorder %s23, 0
      %p71 = por %p69, %p70
      %s73 = sadd.s32 %s72, 1
      %p76 = scmp.eq.s32.totalorder %s17, 1
      %p77 = scmp.ne.s32.totalorder %s72, %s74
      %p78 = scmp.eq.s32.totalorder %s17, 0
      %p79 = por %p77, %p78
      %p80 = scmp.ne.s32.totalorder %s72, %s74
      %p81 = scmp.eq.s32.totalorder %s22, 1
      %p82 = por %p80, %p81
      %p83 = scmp.ne.s32.totalorder %s74, %s75
      %p84 = scmp.eq.s32.totalorder %s22, 0
      %p85 = por %p83, %p84
      %p86 = scmp.ne.s32.totalorder %s74, %s75
      %p87 = scmp.eq.s32.totalorder %s23, 1
      %p88 = por %p86, %p87
      %p90 = scmp.ne.s32.totalorder %s75, %s89
      %p91 = scmp.eq.s32.totalorder %s23, 0
      %p92 = por %p90, %p91
      %s94 = sadd.s32 %s93, 1
      %p97 = scmp.eq.s32.totalorder %s17, 1
      %p98 = scmp.ne.s32.totalorder %s93, %s95
      %p99 = scmp.eq.s32.totalorder %s17, 0
      %p100 = por %p98, %p99
      %p101 = scmp.ne.s32.totalorder %s93, %s95
      %p102 = scmp.eq.s32.totalorder %s22, 1
      %p103 = por %p101, %p102
      %p104 = scmp.ne.s32.totalorder %s95, %s96
      %p105 = scmp.eq.s32.totalorder %s22, 0
      %p106 = por %p104, %p105
      %p107 = scmp.ne.s32.totalorder %s95, %s96
      %p108 = scmp.eq.s32.totalorder %s23, 1
      %p109 = por %p107, %p108
      %p111 = scmp.ne.s32.totalorder %s96, %s110
      %p112 = scmp.eq.s32.totalorder %s23, 0
      %p113 = por %p111, %p112
      %s115 = sadd.s32 %s114, 1
      %p118 = scmp.eq.s32.totalorder %s17, 1
      %p119 = scmp.ne.s32.totalorder %s114, %s116
      %p120 = scmp.eq.s32.totalorder %s17, 0
      %p121 = por %p119, %p120
      %p122 = scmp.ne.s32.totalorder %s114, %s116
      %p123 = scmp.eq.s32.totalorder %s22, 1
      %p124 = por %p122, %p123
      %p125 = scmp.ne.s32.totalorder %s116, %s117
      %p126 = scmp.eq.s32.totalorder %s22, 0
      %p127 = por %p125, %p126
      %p128 = scmp.ne.s32.totalorder %s116, %s117
      %p129 = scmp.eq.s32.totalorder %s23, 1
      %p130 = por %p128, %p129
      %p132 = scmp.ne.s32.totalorder %s117, %s131
      %p133 = scmp.eq.s32.totalorder %s23, 0
      %p134 = por %p132, %p133
      %s135 = ssub.s32 %s17, %s24
      %p136 = scmp.eq.s32.totalorder %s135, 0
      %s138 = sadd.s32 %s137, 1
      %s139 = scalar_select %p136, %s137, %s138
      %p142 = pneg %p136
      %p143 = scmp.eq.s32.totalorder %s17, 1
      %p144 = por %p142, %p143
      %p145 = scmp.ne.s32.totalorder %s137, %s140
      %p146 = scmp.eq.s32.totalorder %s17, 0
      %p147 = por %p145, %p146
      %p148 = scmp.ne.s32.totalorder %s137, %s140
      %p149 = scmp.eq.s32.totalorder %s22, 1
      %p150 = por %p148, %p149
      %p151 = scmp.ne.s32.totalorder %s140, %s141
      %p152 = scmp.eq.s32.totalorder %s22, 0
      %p153 = por %p151, %p152
      %p154 = scmp.ne.s32.totalorder %s140, %s141
      %p155 = scmp.eq.s32.totalorder %s23, 1
      %p156 = por %p154, %p155
      %p158 = scmp.ne.s32.totalorder %s141, %s157
      %p159 = scmp.eq.s32.totalorder %s23, 0
      %p160 = por %p158, %p159
      %p161 = scmp.le.s32.totalorder 1, %s17
      %p162 = scmp.lt.s32.totalorder %s17, 3
      %p163 = pnand %p161, %p162
      %p164 = pneg %p163
      // Predicated region
      $region9: #{tpu_custom_call.1} parent=5 // pred_check
        _
      $region10: #{tpu_custom_call.1} parent=5 // pred_check_branch
        %166 = sbr.rel (%p163) target = $region12
      $region11: #{tpu_custom_call.1} parent=5 // pred_region
        %s167 = ssub.s32 %s17, 1
        // Predicated region
        $region13: #{tpu_custom_call.1} parent=11 // pred_check
          %p168 = pneg %p64
        $region14: #{tpu_custom_call.1} parent=11 // pred_check_branch
          %170 = sbr.rel (%p168) target = $region16
        $region15: #{tpu_custom_call.1} parent=11 // pred_region
          _
        $region16: #{tpu_custom_call.1} parent=11 // pred_fallthru
          _
        // Predicated region
        $region17: #{tpu_custom_call.1} parent=11 // pred_check
          %p171 = pneg %p85
        $region18: #{tpu_custom_call.1} parent=11 // pred_check_branch
          %173 = sbr.rel (%p171) target = $region20
        $region19: #{tpu_custom_call.1} parent=11 // pred_region
          _
        $region20: #{tpu_custom_call.1} parent=11 // pred_fallthru
          _
        // Predicated region
        $region21: #{tpu_custom_call.1} parent=11 // pred_check
          %p174 = pneg %p106
        $region22: #{tpu_custom_call.1} parent=11 // pred_check_branch
          %176 = sbr.rel (%p174) target = $region24
        $region23: #{tpu_custom_call.1} parent=11 // pred_region
          _
        $region24: #{tpu_custom_call.1} parent=11 // pred_fallthru
          _
        // Predicated region
        $region25: #{tpu_custom_call.1} parent=11 // pred_check
          %p177 = pneg %p127
        $region26: #{tpu_custom_call.1} parent=11 // pred_check_branch
          %179 = sbr.rel (%p177) target = $region28
        $region27: #{tpu_custom_call.1} parent=11 // pred_region
          _
        $region28: #{tpu_custom_call.1} parent=11 // pred_fallthru
          _
      $region12: #{tpu_custom_call.1} parent=5 // pred_fallthru
        _
      %p180 = scmp.lt.s32.totalorder %s17, 2
      // Predicated region
      $region29: #{tpu_custom_call.1} parent=5 // pred_check
        %p181 = pneg %p180
      $region30: #{tpu_custom_call.1} parent=5 // pred_check_branch
        %183 = sbr.rel (%p181) target = $region32
      $region31: #{tpu_custom_call.1} parent=5 // pred_region
        // Predicated region
        $region33: #{tpu_custom_call.1} parent=31 // pred_check
          %p184 = pneg %p37
        $region34: #{tpu_custom_call.1} parent=31 // pred_check_branch
          %186 = sbr.rel (%p184) target = $region36
        $region35: #{tpu_custom_call.1} parent=31 // pred_region
          %s187 = sand.u32 %s27, 1
          %s188 = scalar_lea.sflag [#allocation3], %s187
          %s189 = sand.u32 %s27, 1
          %s190 = smul.addr %s189, 64
          %s191 = scalar_lea.vmem [#allocation2], %s190
          %s193 = ssub.s32 1024, 1024
          %194 = vsyncadd %s188, %s193
          %s195 = smul.addr %s17, 16
          %s196 = smul.addr %s195, 64
          %s197 = scalar_lea.hbm %s0, %s196
          %s199 = sshll.u32 %s191, 4
          %s200 = int_to_ptr.vmem [resolvable:$true] %s199
          %202 = dma.hbm_to_vmem [thread:$0]  %s197, 1024, %s200, %s188
        $region36: #{tpu_custom_call.1} parent=31 // pred_fallthru
          _
      $region32: #{tpu_custom_call.1} parent=5 // pred_fallthru
        _
      %p203 = scmp.le.s32.totalorder 1, %s17
      %p204 = scmp.lt.s32.totalorder %s17, 3
      %p205 = pnand %p203, %p204
      %p206 = pneg %p205
      // Predicated region
      $region37: #{tpu_custom_call.1} parent=5 // pred_check
        _
      $region38: #{tpu_custom_call.1} parent=5 // pred_check_branch
        %208 = sbr.rel (%p205) target = $region40
      $region39: #{tpu_custom_call.1} parent=5 // pred_region
        %s209 = ssub.s32 %s17, 1
        %s210 = sand.u32 %s30, 1
        %s211 = scalar_lea.sflag [#allocation3], %s210
        %s212 = sand.u32 %s30, 1
        %s213 = smul.addr %s212, 64
        %s214 = scalar_lea.vmem [#allocation2], %s213
        // Predicated region
        $region41: #{tpu_custom_call.1} parent=39 // pred_check
          %p215 = pneg %p43
        $region42: #{tpu_custom_call.1} parent=39 // pred_check_branch
          %217 = sbr.rel (%p215) target = $region44
        $region43: #{tpu_custom_call.1} parent=39 // pred_region
          %218 = dma.done %s211, 1024
        $region44: #{tpu_custom_call.1} parent=39 // pred_fallthru
          _
        %s219 = sand.u32 %s30, 1
        %s220 = scalar_lea.sflag [#allocation3], %s219
        %s221 = sand.u32 %s30, 1
        %s222 = smul.addr %s221, 64
        %s223 = scalar_lea.vmem [#allocation2], %s222
        %p224 = pneg %p43
        %p225 = pneg %p40
        %p226 = pneg %p64
        %p227 = pneg %p61
        %p228 = pneg %p85
        %p229 = pneg %p82
        %p230 = pneg %p106
        %p231 = pneg %p103
        %p232 = pneg %p127
        %p233 = pneg %p124
        %p234 = pneg %p153
        %p235 = pneg %p150
        %s236 = sand.u32 %s140, 1
        %s237 = scalar_lea.sflag [#allocation4], %s236
        %s238 = sand.u32 %s140, 1
        %s239 = smul.addr %s238, 16
        %s240 = scalar_lea.vmem [#allocation5], %s239
        %v241 = vld [vmem:[%s214] sm:$0xff]
        %v242 = vld [vmem:[%s214 + $0x8] sm:$0xff]
        %v243 = vld [vmem:[%s214 + $0x10] sm:$0xff]
        %v244 = vld [vmem:[%s214 + $0x18] sm:$0xff]
        %v245 = vld [vmem:[%s214 + $0x20] sm:$0xff]
        %v246 = vld [vmem:[%s214 + $0x28] sm:$0xff]
        %v247 = vld [vmem:[%s214 + $0x30] sm:$0xff]
        %v248 = vld [vmem:[%s214 + $0x38] sm:$0xff]
        %v249 = vld [vmem:[%s1] sm:$0xff]
        %v250 = vld [vmem:[%s1 + $0x8] sm:$0xff]
        %v251 = vld [vmem:[%s2] sm:$0xff]
        %v252 = vld [vmem:[%s2 + $0x8] sm:$0xff]
        %v262 = vunpack.c.l.s4 1966171168
        %v263 = vunpack.c.0.s8 %v262
        %v264 = vlaneseq
        %v265 = vshrl.u32 %v264, 7
        %v266 = vsub.s32 %v263, %v265
        %v267 = vrot.slane %v241, %v266
        %v269 = vunpack.c.l.s4 1966171168
        %v270 = vunpack.c.0.s8 %v269
        %v271 = vlaneseq
        %v272 = vshrl.u32 %v271, 7
        %v273 = vsub.s32 %v270, %v272
        %v274 = vrot.slane %v242, %v273
        %v276 = vunpack.c.l.s4 1966171168
        %v277 = vunpack.c.0.s8 %v276
        %v278 = vlaneseq
        %v279 = vshrl.u32 %v278, 7
        %v280 = vsub.s32 %v277, %v279
        %v281 = vrot.slane %v243, %v280
        %v283 = vunpack.c.l.s4 1966171168
        %v284 = vunpack.c.0.s8 %v283
        %v285 = vlaneseq
        %v286 = vshrl.u32 %v285, 7
        %v287 = vsub.s32 %v284, %v286
        %v288 = vrot.slane %v244, %v287
        %v289 = vcombine.low %v267, %v274
        %v290 = vcombine.high %v267, %v274
        %v291 = vcombine.low %v281, %v288
        %v292 = vcombine.high %v281, %v288
        %v294 = vunpack.c.l.s4 1966171168
        %v295 = vunpack.c.0.s8 %v294
        %v296 = vlaneseq
        %v297 = vshrl.u32 %v296, 7
        %v298 = vsub.s32 %v295, %v297
        %v299 = vrot.slane %v289, %v298
        %v301 = vunpack.c.l.s4 1966171168
        %v302 = vunpack.c.0.s8 %v301
        %v303 = vlaneseq
        %v304 = vshrl.u32 %v303, 7
        %v305 = vsub.s32 %v302, %v304
        %v306 = vrot.slane %v290, %v305
        %v308 = vunpack.c.l.s4 1966171168
        %v309 = vunpack.c.0.s8 %v308
        %v310 = vlaneseq
        %v311 = vshrl.u32 %v310, 7
        %v312 = vsub.s32 %v309, %v311
        %v313 = vrot.slane %v291, %v312
        %v315 = vunpack.c.l.s4 1966171168
        %v316 = vunpack.c.0.s8 %v315
        %v317 = vlaneseq
        %v318 = vshrl.u32 %v317, 7
        %v319 = vsub.s32 %v316, %v318
        %v320 = vrot.slane %v292, %v319
        %v321 = vcombine.low %v299, %v313
        %v322 = vcombine.high %v299, %v313
        %v323 = vcombine.low %v306, %v320
        %v324 = vcombine.high %v306, %v320
        %v326 = vunpack.c.l.s4 1966171168
        %v327 = vunpack.c.0.s8 %v326
        %v328 = vlaneseq
        %v329 = vshrl.u32 %v328, 7
        %v330 = vsub.s32 %v327, %v329
        %v331 = vrot.slane %v245, %v330
        %v333 = vunpack.c.l.s4 1966171168
        %v334 = vunpack.c.0.s8 %v333
        %v335 = vlaneseq
        %v336 = vshrl.u32 %v335, 7
        %v337 = vsub.s32 %v334, %v336
        %v338 = vrot.slane %v246, %v337
        %v340 = vunpack.c.l.s4 1966171168
        %v341 = vunpack.c.0.s8 %v340
        %v342 = vlaneseq
        %v343 = vshrl.u32 %v342, 7
        %v344 = vsub.s32 %v341, %v343
        %v345 = vrot.slane %v247, %v344
        %v347 = vunpack.c.l.s4 1966171168
        %v348 = vunpack.c.0.s8 %v347
        %v349 = vlaneseq
        %v350 = vshrl.u32 %v349, 7
        %v351 = vsub.s32 %v348, %v350
        %v352 = vrot.slane %v248, %v351
        %v353 = vcombine.low %v331, %v338
        %v354 = vcombine.high %v331, %v338
        %v355 = vcombine.low %v345, %v352
        %v356 = vcombine.high %v345, %v352
        %v358 = vunpack.c.l.s4 1966171168
        %v359 = vunpack.c.0.s8 %v358
        %v360 = vlaneseq
        %v361 = vshrl.u32 %v360, 7
        %v362 = vsub.s32 %v359, %v361
        %v363 = vrot.slane %v353, %v362
        %v365 = vunpack.c.l.s4 1966171168
        %v366 = vunpack.c.0.s8 %v365
        %v367 = vlaneseq
        %v368 = vshrl.u32 %v367, 7
        %v369 = vsub.s32 %v366, %v368
        %v370 = vrot.slane %v354, %v369
        %v372 = vunpack.c.l.s4 1966171168
        %v373 = vunpack.c.0.s8 %v372
        %v374 = vlaneseq
        %v375 = vshrl.u32 %v374, 7
        %v376 = vsub.s32 %v373, %v375
        %v377 = vrot.slane %v355, %v376
        %v379 = vunpack.c.l.s4 1966171168
        %v380 = vunpack.c.0.s8 %v379
        %v381 = vlaneseq
        %v382 = vshrl.u32 %v381, 7
        %v383 = vsub.s32 %v380, %v382
        %v384 = vrot.slane %v356, %v383
        %v385 = vcombine.low %v363, %v377
        %v386 = vcombine.high %v363, %v377
        %v387 = vcombine.low %v370, %v384
        %v388 = vcombine.high %v370, %v384
        %v389 = vlaneseq
        %v390 = vshrl.u32 %v389, 7
        %v391 = vsub.s32 0, %v390
        %v392 = vrot.slane %v321, %v391
        %v393 = vlaneseq
        %v394 = vshrl.u32 %v393, 7
        %v395 = vsub.s32 1, %v394
        %v396 = vrot.slane %v321, %v395
        %v397 = vlaneseq
        %v398 = vshrl.u32 %v397, 7
        %v399 = vsub.s32 2, %v398
        %v400 = vrot.slane %v321, %v399
        %v401 = vlaneseq
        %v402 = vshrl.u32 %v401, 7
        %v403 = vsub.s32 3, %v402
        %v404 = vrot.slane %v321, %v403
        %v405 = vlaneseq
        %v406 = vshrl.u32 %v405, 7
        %v407 = vsub.s32 4, %v406
        %v408 = vrot.slane %v321, %v407
        %v409 = vlaneseq
        %v410 = vshrl.u32 %v409, 7
        %v411 = vsub.s32 5, %v410
        %v412 = vrot.slane %v321, %v411
        %v413 = vlaneseq
        %v414 = vshrl.u32 %v413, 7
        %v415 = vsub.s32 6, %v414
        %v416 = vrot.slane %v321, %v415
        %v417 = vlaneseq
        %v418 = vshrl.u32 %v417, 7
        %v419 = vsub.s32 7, %v418
        %v420 = vrot.slane %v321, %v419
        %v421 = vlaneseq
        %v422 = vshrl.u32 %v421, 7
        %v423 = vsub.s32 0, %v422
        %v424 = vrot.slane %v385, %v423
        %v425 = vlaneseq
        %v426 = vshrl.u32 %v425, 7
        %v427 = vsub.s32 1, %v426
        %v428 = vrot.slane %v385, %v427
        %v429 = vlaneseq
        %v430 = vshrl.u32 %v429, 7
        %v431 = vsub.s32 2, %v430
        %v432 = vrot.slane %v385, %v431
        %v433 = vlaneseq
        %v434 = vshrl.u32 %v433, 7
        %v435 = vsub.s32 3, %v434
        %v436 = vrot.slane %v385, %v435
        %v437 = vlaneseq
        %v438 = vshrl.u32 %v437, 7
        %v439 = vsub.s32 4, %v438
        %v440 = vrot.slane %v385, %v439
        %v441 = vlaneseq
        %v442 = vshrl.u32 %v441, 7
        %v443 = vsub.s32 5, %v442
        %v444 = vrot.slane %v385, %v443
        %v445 = vlaneseq
        %v446 = vshrl.u32 %v445, 7
        %v447 = vsub.s32 6, %v446
        %v448 = vrot.slane %v385, %v447
        %v449 = vlaneseq
        %v450 = vshrl.u32 %v449, 7
        %v451 = vsub.s32 7, %v450
        %v452 = vrot.slane %v385, %v451
        %v453 = vlaneseq
        %v454 = vshrl.u32 %v453, 7
        %v455 = vsub.s32 0, %v454
        %v456 = vrot.slane %v323, %v455
        %v457 = vlaneseq
        %v458 = vshrl.u32 %v457, 7
        %v459 = vsub.s32 1, %v458
        %v460 = vrot.slane %v323, %v459
        %v461 = vlaneseq
        %v462 = vshrl.u32 %v461, 7
        %v463 = vsub.s32 2, %v462
        %v464 = vrot.slane %v323, %v463
        %v465 = vlaneseq
        %v466 = vshrl.u32 %v465, 7
        %v467 = vsub.s32 3, %v466
        %v468 = vrot.slane %v323, %v467
        %v469 = vlaneseq
        %v470 = vshrl.u32 %v469, 7
        %v471 = vsub.s32 4, %v470
        %v472 = vrot.slane %v323, %v471
        %v473 = vlaneseq
        %v474 = vshrl.u32 %v473, 7
        %v475 = vsub.s32 5, %v474
        %v476 = vrot.slane %v323, %v475
        %v477 = vlaneseq
        %v478 = vshrl.u32 %v477, 7
        %v479 = vsub.s32 6, %v478
        %v480 = vrot.slane %v323, %v479
        %v481 = vlaneseq
        %v482 = vshrl.u32 %v481, 7
        %v483 = vsub.s32 7, %v482
        %v484 = vrot.slane %v323, %v483
        %v485 = vlaneseq
        %v486 = vshrl.u32 %v485, 7
        %v487 = vsub.s32 0, %v486
        %v488 = vrot.slane %v387, %v487
        %v489 = vlaneseq
        %v490 = vshrl.u32 %v489, 7
        %v491 = vsub.s32 1, %v490
        %v492 = vrot.slane %v387, %v491
        %v493 = vlaneseq
        %v494 = vshrl.u32 %v493, 7
        %v495 = vsub.s32 2, %v494
        %v496 = vrot.slane %v387, %v495
        %v497 = vlaneseq
        %v498 = vshrl.u32 %v497, 7
        %v499 = vsub.s32 3, %v498
        %v500 = vrot.slane %v387, %v499
        %v501 = vlaneseq
        %v502 = vshrl.u32 %v501, 7
        %v503 = vsub.s32 4, %v502
        %v504 = vrot.slane %v387, %v503
        %v505 = vlaneseq
        %v506 = vshrl.u32 %v505, 7
        %v507 = vsub.s32 5, %v506
        %v508 = vrot.slane %v387, %v507
        %v509 = vlaneseq
        %v510 = vshrl.u32 %v509, 7
        %v511 = vsub.s32 6, %v510
        %v512 = vrot.slane %v387, %v511
        %v513 = vlaneseq
        %v514 = vshrl.u32 %v513, 7
        %v515 = vsub.s32 7, %v514
        %v516 = vrot.slane %v387, %v515
        %v517 = vlaneseq
        %v518 = vshrl.u32 %v517, 7
        %v519 = vsub.s32 0, %v518
        %v520 = vrot.slane %v322, %v519
        %v521 = vlaneseq
        %v522 = vshrl.u32 %v521, 7
        %v523 = vsub.s32 1, %v522
        %v524 = vrot.slane %v322, %v523
        %v525 = vlaneseq
        %v526 = vshrl.u32 %v525, 7
        %v527 = vsub.s32 2, %v526
        %v528 = vrot.slane %v322, %v527
        %v529 = vlaneseq
        %v530 = vshrl.u32 %v529, 7
        %v531 = vsub.s32 3, %v530
        %v532 = vrot.slane %v322, %v531
        %v533 = vlaneseq
        %v534 = vshrl.u32 %v533, 7
        %v535 = vsub.s32 4, %v534
        %v536 = vrot.slane %v322, %v535
        %v537 = vlaneseq
        %v538 = vshrl.u32 %v537, 7
        %v539 = vsub.s32 5, %v538
        %v540 = vrot.slane %v322, %v539
        %v541 = vlaneseq
        %v542 = vshrl.u32 %v541, 7
        %v543 = vsub.s32 6, %v542
        %v544 = vrot.slane %v322, %v543
        %v545 = vlaneseq
        %v546 = vshrl.u32 %v545, 7
        %v547 = vsub.s32 7, %v546
        %v548 = vrot.slane %v322, %v547
        %v549 = vlaneseq
        %v550 = vshrl.u32 %v549, 7
        %v551 = vsub.s32 0, %v550
        %v552 = vrot.slane %v386, %v551
        %v553 = vlaneseq
        %v554 = vshrl.u32 %v553, 7
        %v555 = vsub.s32 1, %v554
        %v556 = vrot.slane %v386, %v555
        %v557 = vlaneseq
        %v558 = vshrl.u32 %v557, 7
        %v559 = vsub.s32 2, %v558
        %v560 = vrot.slane %v386, %v559
        %v561 = vlaneseq
        %v562 = vshrl.u32 %v561, 7
        %v563 = vsub.s32 3, %v562
        %v564 = vrot.slane %v386, %v563
        %v565 = vlaneseq
        %v566 = vshrl.u32 %v565, 7
        %v567 = vsub.s32 4, %v566
        %v568 = vrot.slane %v386, %v567
        %v569 = vlaneseq
        %v570 = vshrl.u32 %v569, 7
        %v571 = vsub.s32 5, %v570
        %v572 = vrot.slane %v386, %v571
        %v573 = vlaneseq
        %v574 = vshrl.u32 %v573, 7
        %v575 = vsub.s32 6, %v574
        %v576 = vrot.slane %v386, %v575
        %v577 = vlaneseq
        %v578 = vshrl.u32 %v577, 7
        %v579 = vsub.s32 7, %v578
        %v580 = vrot.slane %v386, %v579
        %v581 = vlaneseq
        %v582 = vshrl.u32 %v581, 7
        %v583 = vsub.s32 0, %v582
        %v584 = vrot.slane %v324, %v583
        %v585 = vlaneseq
        %v586 = vshrl.u32 %v585, 7
        %v587 = vsub.s32 1, %v586
        %v588 = vrot.slane %v324, %v587
        %v589 = vlaneseq
        %v590 = vshrl.u32 %v589, 7
        %v591 = vsub.s32 2, %v590
        %v592 = vrot.slane %v324, %v591
        %v593 = vlaneseq
        %v594 = vshrl.u32 %v593, 7
        %v595 = vsub.s32 3, %v594
        %v596 = vrot.slane %v324, %v595
        %v597 = vlaneseq
        %v598 = vshrl.u32 %v597, 7
        %v599 = vsub.s32 4, %v598
        %v600 = vrot.slane %v324, %v599
        %v601 = vlaneseq
        %v602 = vshrl.u32 %v601, 7
        %v603 = vsub.s32 5, %v602
        %v604 = vrot.slane %v324, %v603
        %v605 = vlaneseq
        %v606 = vshrl.u32 %v605, 7
        %v607 = vsub.s32 6, %v606
        %v608 = vrot.slane %v324, %v607
        %v609 = vlaneseq
        %v610 = vshrl.u32 %v609, 7
        %v611 = vsub.s32 7, %v610
        %v612 = vrot.slane %v324, %v611
        %v613 = vlaneseq
        %v614 = vshrl.u32 %v613, 7
        %v615 = vsub.s32 0, %v614
        %v616 = vrot.slane %v388, %v615
        %v617 = vlaneseq
        %v618 = vshrl.u32 %v617, 7
        %v619 = vsub.s32 1, %v618
        %v620 = vrot.slane %v388, %v619
        %v621 = vlaneseq
        %v622 = vshrl.u32 %v621, 7
        %v623 = vsub.s32 2, %v622
        %v624 = vrot.slane %v388, %v623
        %v625 = vlaneseq
        %v626 = vshrl.u32 %v625, 7
        %v627 = vsub.s32 3, %v626
        %v628 = vrot.slane %v388, %v627
        %v629 = vlaneseq
        %v630 = vshrl.u32 %v629, 7
        %v631 = vsub.s32 4, %v630
        %v632 = vrot.slane %v388, %v631
        %v633 = vlaneseq
        %v634 = vshrl.u32 %v633, 7
        %v635 = vsub.s32 5, %v634
        %v636 = vrot.slane %v388, %v635
        %v637 = vlaneseq
        %v638 = vshrl.u32 %v637, 7
        %v639 = vsub.s32 6, %v638
        %v640 = vrot.slane %v388, %v639
        %v641 = vlaneseq
        %v642 = vshrl.u32 %v641, 7
        %v643 = vsub.s32 7, %v642
        %v644 = vrot.slane %v388, %v643
        %v709 = vcombine.high %v241, %v241
        %v710 = vcombine.high %v242, %v242
        %v711 = vcombine.high %v243, %v243
        %v712 = vcombine.high %v244, %v244
        %v713 = vcombine.high %v245, %v245
        %v714 = vcombine.high %v246, %v246
        %v715 = vcombine.high %v247, %v247
        %v716 = vcombine.high %v248, %v248
        %v725 = vmul.f32 %v392, %v241
        %v726 = vmul.f32 %v396, %v709
        %v727 = vmul.f32 %v400, %v242
        %v728 = vmul.f32 %v404, %v710
        %v729 = vmul.f32 %v408, %v243
        %v730 = vmul.f32 %v412, %v711
        %v731 = vmul.f32 %v416, %v244
        %v732 = vmul.f32 %v420, %v712
        %v733 = vmul.f32 %v424, %v245
        %v734 = vmul.f32 %v428, %v713
        %v735 = vmul.f32 %v432, %v246
        %v736 = vmul.f32 %v436, %v714
        %v737 = vmul.f32 %v440, %v247
        %v738 = vmul.f32 %v444, %v715
        %v739 = vmul.f32 %v448, %v248
        %v740 = vmul.f32 %v452, %v716
        %v741 = vmul.f32 %v456, %v241
        %v742 = vmul.f32 %v460, %v709
        %v743 = vmul.f32 %v464, %v242
        %v744 = vmul.f32 %v468, %v710
        %v745 = vmul.f32 %v472, %v243
        %v746 = vmul.f32 %v476, %v711
        %v747 = vmul.f32 %v480, %v244
        %v748 = vmul.f32 %v484, %v712
        %v749 = vmul.f32 %v488, %v245
        %v750 = vmul.f32 %v492, %v713
        %v751 = vmul.f32 %v496, %v246
        %v752 = vmul.f32 %v500, %v714
        %v753 = vmul.f32 %v504, %v247
        %v754 = vmul.f32 %v508, %v715
        %v755 = vmul.f32 %v512, %v248
        %v756 = vmul.f32 %v516, %v716
        %v757 = vmul.f32 %v520, %v241
        %v758 = vmul.f32 %v524, %v709
        %v759 = vmul.f32 %v528, %v242
        %v760 = vmul.f32 %v532, %v710
        %v761 = vmul.f32 %v536, %v243
        %v762 = vmul.f32 %v540, %v711
        %v763 = vmul.f32 %v544, %v244
        %v764 = vmul.f32 %v548, %v712
        %v765 = vmul.f32 %v552, %v245
        %v766 = vmul.f32 %v556, %v713
        %v767 = vmul.f32 %v560, %v246
        %v768 = vmul.f32 %v564, %v714
        %v769 = vmul.f32 %v568, %v247
        %v770 = vmul.f32 %v572, %v715
        %v771 = vmul.f32 %v576, %v248
        %v772 = vmul.f32 %v580, %v716
        %v773 = vmul.f32 %v584, %v241
        %v774 = vmul.f32 %v588, %v709
        %v775 = vmul.f32 %v592, %v242
        %v776 = vmul.f32 %v596, %v710
        %v777 = vmul.f32 %v600, %v243
        %v778 = vmul.f32 %v604, %v711
        %v779 = vmul.f32 %v608, %v244
        %v780 = vmul.f32 %v612, %v712
        %v781 = vmul.f32 %v616, %v245
        %v782 = vmul.f32 %v620, %v713
        %v783 = vmul.f32 %v624, %v246
        %v784 = vmul.f32 %v628, %v714
        %v785 = vmul.f32 %v632, %v247
        %v786 = vmul.f32 %v636, %v715
        %v787 = vmul.f32 %v640, %v248
        %v788 = vmul.f32 %v644, %v716
        %v853 = vcombine.low %v725, %v726
        %v854 = vcombine.low %v727, %v728
        %v855 = vcombine.low %v729, %v730
        %v856 = vcombine.low %v731, %v732
        %v857 = vcombine.low %v733, %v734
        %v858 = vcombine.low %v735, %v736
        %v859 = vcombine.low %v737, %v738
        %v860 = vcombine.low %v739, %v740
        %v861 = vcombine.low %v741, %v742
        %v862 = vcombine.low %v743, %v744
        %v863 = vcombine.low %v745, %v746
        %v864 = vcombine.low %v747, %v748
        %v865 = vcombine.low %v749, %v750
        %v866 = vcombine.low %v751, %v752
        %v867 = vcombine.low %v753, %v754
        %v868 = vcombine.low %v755, %v756
        %v869 = vcombine.low %v757, %v758
        %v870 = vcombine.low %v759, %v760
        %v871 = vcombine.low %v761, %v762
        %v872 = vcombine.low %v763, %v764
        %v873 = vcombine.low %v765, %v766
        %v874 = vcombine.low %v767, %v768
        %v875 = vcombine.low %v769, %v770
        %v876 = vcombine.low %v771, %v772
        %v877 = vcombine.low %v773, %v774
        %v878 = vcombine.low %v775, %v776
        %v879 = vcombine.low %v777, %v778
        %v880 = vcombine.low %v779, %v780
        %v881 = vcombine.low %v781, %v782
        %v882 = vcombine.low %v783, %v784
        %v883 = vcombine.low %v785, %v786
        %v884 = vcombine.low %v787, %v788
        %886 = vset.pattern.permute.xlu0 0
        %887 = vperm.xlu0 %886, %v251
        %v888 = vpop.permute.xlu0 %887
        %891 = vset.pattern.permute.xlu0 0
        %892 = vperm.xlu0 %891, %v252
        %v893 = vpop.permute.xlu0 %892
        %v895 = vcombine.low %v853, %v861
        %v896 = vcombine.high %v853, %v861
        %v897 = vcombine.low %v854, %v862
        %v898 = vcombine.high %v854, %v862
        %v899 = vcombine.low %v855, %v863
        %v900 = vcombine.high %v855, %v863
        %v901 = vcombine.low %v856, %v864
        %v902 = vcombine.high %v856, %v864
        %v903 = vcombine.low %v857, %v865
        %v904 = vcombine.high %v857, %v865
        %v905 = vcombine.low %v858, %v866
        %v906 = vcombine.high %v858, %v866
        %v907 = vcombine.low %v859, %v867
        %v908 = vcombine.high %v859, %v867
        %v909 = vcombine.low %v860, %v868
        %v910 = vcombine.high %v860, %v868
        %v911 = vcombine.low %v869, %v877
        %v912 = vcombine.high %v869, %v877
        %v913 = vcombine.low %v870, %v878
        %v914 = vcombine.high %v870, %v878
        %v915 = vcombine.low %v871, %v879
        %v916 = vcombine.high %v871, %v879
        %v917 = vcombine.low %v872, %v880
        %v918 = vcombine.high %v872, %v880
        %v919 = vcombine.low %v873, %v881
        %v920 = vcombine.high %v873, %v881
        %v921 = vcombine.low %v874, %v882
        %v922 = vcombine.high %v874, %v882
        %v923 = vcombine.low %v875, %v883
        %v924 = vcombine.high %v875, %v883
        %v925 = vcombine.low %v876, %v884
        %v926 = vcombine.high %v876, %v884
        %vm959 = vcmask 130048
        %v961 = vsel %vm959, %v249, 0
        %v964 = vsel %vm959, %v250, 0
        %966 = vmatprep.subr.mxu0 0.0
        %967 = vmatpush1.msra.mxu0 0.0
        %968 = vmatprep.subr.mxu0 0.0
        %969 = vmatpush1.msra.mxu0 0.0
        %970 = vmatprep.subr.mxu0 0.0
        %971 = vmatpush1.msra.mxu0 0.0
        %972 = vmatprep.subr.mxu0 0.0
        %973 = vmatpush1.msra.mxu0 0.0
        %974 = vmatprep.subr.mxu0 0.0
        %975 = vmatpush1.msra.mxu0 0.0
        %976 = vmatprep.subr.mxu0 0.0
        %977 = vmatpush1.msra.mxu0 0.0
        %978 = vmatprep.subr.mxu0 0.0
        %979 = vmatpush1.msra.mxu0 0.0
        %980 = vmatprep.subr.mxu0 0.0
        %981 = vmatpush1.msra.mxu0 0.0
        %982 = vmatprep.subr.mxu0 0.0
        %983 = vmatpush1.msra.mxu0 0.0
        %984 = vmatprep.subr.mxu0 0.0
        %985 = vmatpush1.msra.mxu0 0.0
        %986 = vmatprep.subr.mxu0 0.0
        %987 = vmatpush1.msra.mxu0 0.0
        %988 = vmatprep.subr.mxu0 0.0
        %989 = vmatpush1.msra.mxu0 0.0
        %990 = vmatprep.subr.mxu0 0.0
        %991 = vmatpush1.msra.mxu0 0.0
        %992 = vmatprep.subr.mxu0 0.0
        %993 = vmatpush1.msra.mxu0 0.0
        %994 = vmatprep.subr.mxu0 %v912
        %995 = vmatpush1.msra.mxu0 %v911
        %996 = vmatprep.subr.mxu0 %v896
        %997 = vmatpush1.msra.mxu0 %v895
        %998 = vmatprep.subr.mxu0 0.0
        %999 = vmatpush2.msra.mxu0 0.0
        %1000 = vmatprep.subr.mxu0 0.0
        %1001 = vmatpush2.msra.mxu0 0.0
        %1002 = vmatprep.subr.mxu0 0.0
        %1003 = vmatpush2.msra.mxu0 0.0
        %1004 = vmatprep.subr.mxu0 0.0
        %1005 = vmatpush2.msra.mxu0 0.0
        %1006 = vmatprep.subr.mxu0 0.0
        %1007 = vmatpush2.msra.mxu0 0.0
        %1008 = vmatprep.subr.mxu0 0.0
        %1009 = vmatpush2.msra.mxu0 0.0
        %1010 = vmatprep.subr.mxu0 0.0
        %1011 = vmatpush2.msra.mxu0 0.0
        %1012 = vmatprep.subr.mxu0 0.0
        %1013 = vmatpush2.msra.mxu0 0.0
        %1014 = vmatprep.subr.mxu0 0.0
        %1015 = vmatpush2.msra.mxu0 0.0
        %1016 = vmatprep.subr.mxu0 0.0
        %1017 = vmatpush2.msra.mxu0 0.0
        %1018 = vmatprep.subr.mxu0 0.0
        %1019 = vmatpush2.msra.mxu0 0.0
        %1020 = vmatprep.subr.mxu0 0.0
        %1021 = vmatpush2.msra.mxu0 0.0
        %1022 = vmatprep.subr.mxu0 0.0
        %1023 = vmatpush2.msra.mxu0 0.0
        %1024 = vmatprep.subr.mxu0 0.0
        %1025 = vmatpush2.msra.mxu0 0.0
        %1026 = vmatprep.subr.mxu0 0.0
        %1027 = vmatpush2.msra.mxu0 0.0
        %1028 = vmatprep.subr.mxu0 0.0
        %1029 = vmatpush2.msra.mxu0 0.0
        %1030 = vmatprep.mubr.f32.mxu0 0.0
        %1031 = vmatmul.mubr.f32.gmra.mxu0 %v961
        %v1032 = vpop.f32.mrf.mxu0
        %v1033 = vadd.f32 %v888, %v1032
        %v1034 = vpop.f32.mrf.mxu0
        %v1035 = vadd.f32 %v888, %v1034
        %1036 = vmatprep.mubr.f32.mxu0 0.0
        %1037 = vmatmul.mubr.f32.gmra.mxu0 %v964
        %v1038 = vpop.f32.mrf.mxu0
        %v1039 = vadd.f32 %v893, %v1038
        %v1040 = vpop.f32.mrf.mxu0
        %v1041 = vadd.f32 %v893, %v1040
        %1042 = vdwg.mxu0
        %1043 = vmatprep.subr.mxu0 0.0
        %1044 = vmatpush1.msra.mxu0 0.0
        %1045 = vmatprep.subr.mxu0 0.0
        %1046 = vmatpush1.msra.mxu0 0.0
        %1047 = vmatprep.subr.mxu0 0.0
        %1048 = vmatpush1.msra.mxu0 0.0
        %1049 = vmatprep.subr.mxu0 0.0
        %1050 = vmatpush1.msra.mxu0 0.0
        %1051 = vmatprep.subr.mxu0 0.0
        %1052 = vmatpush1.msra.mxu0 0.0
        %1053 = vmatprep.subr.mxu0 0.0
        %1054 = vmatpush1.msra.mxu0 0.0
        %1055 = vmatprep.subr.mxu0 0.0
        %1056 = vmatpush1.msra.mxu0 0.0
        %1057 = vmatprep.subr.mxu0 0.0
        %1058 = vmatpush1.msra.mxu0 0.0
        %1059 = vmatprep.subr.mxu0 0.0
        %1060 = vmatpush1.msra.mxu0 0.0
        %1061 = vmatprep.subr.mxu0 0.0
        %1062 = vmatpush1.msra.mxu0 0.0
        %1063 = vmatprep.subr.mxu0 0.0
        %1064 = vmatpush1.msra.mxu0 0.0
        %1065 = vmatprep.subr.mxu0 0.0
        %1066 = vmatpush1.msra.mxu0 0.0
        %1067 = vmatprep.subr.mxu0 0.0
        %1068 = vmatpush1.msra.mxu0 0.0
        %1069 = vmatprep.subr.mxu0 0.0
        %1070 = vmatpush1.msra.mxu0 0.0
        %1071 = vmatprep.subr.mxu0 %v914
        %1072 = vmatpush1.msra.mxu0 %v913
        %1073 = vmatprep.subr.mxu0 %v898
        %1074 = vmatpush1.msra.mxu0 %v897
        %1075 = vmatprep.subr.mxu0 0.0
        %1076 = vmatpush2.msra.mxu0 0.0
        %1077 = vmatprep.subr.mxu0 0.0
        %1078 = vmatpush2.msra.mxu0 0.0
        %1079 = vmatprep.subr.mxu0 0.0
        %1080 = vmatpush2.msra.mxu0 0.0
        %1081 = vmatprep.subr.mxu0 0.0
        %1082 = vmatpush2.msra.mxu0 0.0
        %1083 = vmatprep.subr.mxu0 0.0
        %1084 = vmatpush2.msra.mxu0 0.0
        %1085 = vmatprep.subr.mxu0 0.0
        %1086 = vmatpush2.msra.mxu0 0.0
        %1087 = vmatprep.subr.mxu0 0.0
        %1088 = vmatpush2.msra.mxu0 0.0
        %1089 = vmatprep.subr.mxu0 0.0
        %1090 = vmatpush2.msra.mxu0 0.0
        %1091 = vmatprep.subr.mxu0 0.0
        %1092 = vmatpush2.msra.mxu0 0.0
        %1093 = vmatprep.subr.mxu0 0.0
        %1094 = vmatpush2.msra.mxu0 0.0
        %1095 = vmatprep.subr.mxu0 0.0
        %1096 = vmatpush2.msra.mxu0 0.0
        %1097 = vmatprep.subr.mxu0 0.0
        %1098 = vmatpush2.msra.mxu0 0.0
        %1099 = vmatprep.subr.mxu0 0.0
        %1100 = vmatpush2.msra.mxu0 0.0
        %1101 = vmatprep.subr.mxu0 0.0
        %1102 = vmatpush2.msra.mxu0 0.0
        %1103 = vmatprep.subr.mxu0 0.0
        %1104 = vmatpush2.msra.mxu0 0.0
        %1105 = vmatprep.subr.mxu0 0.0
        %1106 = vmatpush2.msra.mxu0 0.0
        %1107 = vmatprep.mubr.f32.mxu0 0.0
        %1108 = vmatmul.mubr.f32.gmra.mxu0 %v961
        %v1109 = vpop.f32.mrf.mxu0
        %v1110 = vadd.f32 %v888, %v1109
        %v1111 = vpop.f32.mrf.mxu0
        %v1112 = vadd.f32 %v888, %v1111
        %1113 = vmatprep.mubr.f32.mxu0 0.0
        %1114 = vmatmul.mubr.f32.gmra.mxu0 %v964
        %v1115 = vpop.f32.mrf.mxu0
        %v1116 = vadd.f32 %v893, %v1115
        %v1117 = vpop.f32.mrf.mxu0
        %v1118 = vadd.f32 %v893, %v1117
        %1119 = vdwg.mxu0
        %1120 = vmatprep.subr.mxu0 0.0
        %1121 = vmatpush1.msra.mxu0 0.0
        %1122 = vmatprep.subr.mxu0 0.0
        %1123 = vmatpush1.msra.mxu0 0.0
        %1124 = vmatprep.subr.mxu0 0.0
        %1125 = vmatpush1.msra.mxu0 0.0
        %1126 = vmatprep.subr.mxu0 0.0
        %1127 = vmatpush1.msra.mxu0 0.0
        %1128 = vmatprep.subr.mxu0 0.0
        %1129 = vmatpush1.msra.mxu0 0.0
        %1130 = vmatprep.subr.mxu0 0.0
        %1131 = vmatpush1.msra.mxu0 0.0
        %1132 = vmatprep.subr.mxu0 0.0
        %1133 = vmatpush1.msra.mxu0 0.0
        %1134 = vmatprep.subr.mxu0 0.0
        %1135 = vmatpush1.msra.mxu0 0.0
        %1136 = vmatprep.subr.mxu0 0.0
        %1137 = vmatpush1.msra.mxu0 0.0
        %1138 = vmatprep.subr.mxu0 0.0
        %1139 = vmatpush1.msra.mxu0 0.0
        %1140 = vmatprep.subr.mxu0 0.0
        %1141 = vmatpush1.msra.mxu0 0.0
        %1142 = vmatprep.subr.mxu0 0.0
        %1143 = vmatpush1.msra.mxu0 0.0
        %1144 = vmatprep.subr.mxu0 0.0
        %1145 = vmatpush1.msra.mxu0 0.0
        %1146 = vmatprep.subr.mxu0 0.0
        %1147 = vmatpush1.msra.mxu0 0.0
        %1148 = vmatprep.subr.mxu0 %v916
        %1149 = vmatpush1.msra.mxu0 %v915
        %1150 = vmatprep.subr.mxu0 %v900
        %1151 = vmatpush1.msra.mxu0 %v899
        %1152 = vmatprep.subr.mxu0 0.0
        %1153 = vmatpush2.msra.mxu0 0.0
        %1154 = vmatprep.subr.mxu0 0.0
        %1155 = vmatpush2.msra.mxu0 0.0
        %1156 = vmatprep.subr.mxu0 0.0
        %1157 = vmatpush2.msra.mxu0 0.0
        %1158 = vmatprep.subr.mxu0 0.0
        %1159 = vmatpush2.msra.mxu0 0.0
        %1160 = vmatprep.subr.mxu0 0.0
        %1161 = vmatpush2.msra.mxu0 0.0
        %1162 = vmatprep.subr.mxu0 0.0
        %1163 = vmatpush2.msra.mxu0 0.0
        %1164 = vmatprep.subr.mxu0 0.0
        %1165 = vmatpush2.msra.mxu0 0.0
        %1166 = vmatprep.subr.mxu0 0.0
        %1167 = vmatpush2.msra.mxu0 0.0
        %1168 = vmatprep.subr.mxu0 0.0
        %1169 = vmatpush2.msra.mxu0 0.0
        %1170 = vmatprep.subr.mxu0 0.0
        %1171 = vmatpush2.msra.mxu0 0.0
        %1172 = vmatprep.subr.mxu0 0.0
        %1173 = vmatpush2.msra.mxu0 0.0
        %1174 = vmatprep.subr.mxu0 0.0
        %1175 = vmatpush2.msra.mxu0 0.0
        %1176 = vmatprep.subr.mxu0 0.0
        %1177 = vmatpush2.msra.mxu0 0.0
        %1178 = vmatprep.subr.mxu0 0.0
        %1179 = vmatpush2.msra.mxu0 0.0
        %1180 = vmatprep.subr.mxu0 0.0
        %1181 = vmatpush2.msra.mxu0 0.0
        %1182 = vmatprep.subr.mxu0 0.0
        %1183 = vmatpush2.msra.mxu0 0.0
        %1184 = vmatprep.mubr.f32.mxu0 0.0
        %1185 = vmatmul.mubr.f32.gmra.mxu0 %v961
        %v1186 = vpop.f32.mrf.mxu0
        %v1187 = vadd.f32 %v888, %v1186
        %v1188 = vpop.f32.mrf.mxu0
        %v1189 = vadd.f32 %v888, %v1188
        %1190 = vmatprep.mubr.f32.mxu0 0.0
        %1191 = vmatmul.mubr.f32.gmra.mxu0 %v964
        %v1192 = vpop.f32.mrf.mxu0
        %v1193 = vadd.f32 %v893, %v1192
        %v1194 = vpop.f32.mrf.mxu0
        %v1195 = vadd.f32 %v893, %v1194
        %1196 = vdwg.mxu0
        %1197 = vmatprep.subr.mxu0 0.0
        %1198 = vmatpush1.msra.mxu0 0.0
        %1199 = vmatprep.subr.mxu0 0.0
        %1200 = vmatpush1.msra.mxu0 0.0
        %1201 = vmatprep.subr.mxu0 0.0
        %1202 = vmatpush1.msra.mxu0 0.0
        %1203 = vmatprep.subr.mxu0 0.0
        %1204 = vmatpush1.msra.mxu0 0.0
        %1205 = vmatprep.subr.mxu0 0.0
        %1206 = vmatpush1.msra.mxu0 0.0
        %1207 = vmatprep.subr.mxu0 0.0
        %1208 = vmatpush1.msra.mxu0 0.0
        %1209 = vmatprep.subr.mxu0 0.0
        %1210 = vmatpush1.msra.mxu0 0.0
        %1211 = vmatprep.subr.mxu0 0.0
        %1212 = vmatpush1.msra.mxu0 0.0
        %1213 = vmatprep.subr.mxu0 0.0
        %1214 = vmatpush1.msra.mxu0 0.0
        %1215 = vmatprep.subr.mxu0 0.0
        %1216 = vmatpush1.msra.mxu0 0.0
        %1217 = vmatprep.subr.mxu0 0.0
        %1218 = vmatpush1.msra.mxu0 0.0
        %1219 = vmatprep.subr.mxu0 0.0
        %1220 = vmatpush1.msra.mxu0 0.0
        %1221 = vmatprep.subr.mxu0 0.0
        %1222 = vmatpush1.msra.mxu0 0.0
        %1223 = vmatprep.subr.mxu0 0.0
        %1224 = vmatpush1.msra.mxu0 0.0
        %1225 = vmatprep.subr.mxu0 %v918
        %1226 = vmatpush1.msra.mxu0 %v917
        %1227 = vmatprep.subr.mxu0 %v902
        %1228 = vmatpush1.msra.mxu0 %v901
        %1229 = vmatprep.subr.mxu0 0.0
        %1230 = vmatpush2.msra.mxu0 0.0
        %1231 = vmatprep.subr.mxu0 0.0
        %1232 = vmatpush2.msra.mxu0 0.0
        %1233 = vmatprep.subr.mxu0 0.0
        %1234 = vmatpush2.msra.mxu0 0.0
        %1235 = vmatprep.subr.mxu0 0.0
        %1236 = vmatpush2.msra.mxu0 0.0
        %1237 = vmatprep.subr.mxu0 0.0
        %1238 = vmatpush2.msra.mxu0 0.0
        %1239 = vmatprep.subr.mxu0 0.0
        %1240 = vmatpush2.msra.mxu0 0.0
        %1241 = vmatprep.subr.mxu0 0.0
        %1242 = vmatpush2.msra.mxu0 0.0
        %1243 = vmatprep.subr.mxu0 0.0
        %1244 = vmatpush2.msra.mxu0 0.0
        %1245 = vmatprep.subr.mxu0 0.0
        %1246 = vmatpush2.msra.mxu0 0.0
        %1247 = vmatprep.subr.mxu0 0.0
        %1248 = vmatpush2.msra.mxu0 0.0
        %1249 = vmatprep.subr.mxu0 0.0
        %1250 = vmatpush2.msra.mxu0 0.0
        %1251 = vmatprep.subr.mxu0 0.0
        %1252 = vmatpush2.msra.mxu0 0.0
        %1253 = vmatprep.subr.mxu0 0.0
        %1254 = vmatpush2.msra.mxu0 0.0
        %1255 = vmatprep.subr.mxu0 0.0
        %1256 = vmatpush2.msra.mxu0 0.0
        %1257 = vmatprep.subr.mxu0 0.0
        %1258 = vmatpush2.msra.mxu0 0.0
        %1259 = vmatprep.subr.mxu0 0.0
        %1260 = vmatpush2.msra.mxu0 0.0
        %1261 = vmatprep.mubr.f32.mxu0 0.0
        %1262 = vmatmul.mubr.f32.gmra.mxu0 %v961
        %v1263 = vpop.f32.mrf.mxu0
        %v1264 = vadd.f32 %v888, %v1263
        %v1265 = vpop.f32.mrf.mxu0
        %v1266 = vadd.f32 %v888, %v1265
        %1267 = vmatprep.mubr.f32.mxu0 0.0
        %1268 = vmatmul.mubr.f32.gmra.mxu0 %v964
        %v1269 = vpop.f32.mrf.mxu0
        %v1270 = vadd.f32 %v893, %v1269
        %v1271 = vpop.f32.mrf.mxu0
        %v1272 = vadd.f32 %v893, %v1271
        %1273 = vdwg.mxu0
        %1274 = vmatprep.subr.mxu0 0.0
        %1275 = vmatpush1.msra.mxu0 0.0
        %1276 = vmatprep.subr.mxu0 0.0
        %1277 = vmatpush1.msra.mxu0 0.0
        %1278 = vmatprep.subr.mxu0 0.0
        %1279 = vmatpush1.msra.mxu0 0.0
        %1280 = vmatprep.subr.mxu0 0.0
        %1281 = vmatpush1.msra.mxu0 0.0
        %1282 = vmatprep.subr.mxu0 0.0
        %1283 = vmatpush1.msra.mxu0 0.0
        %1284 = vmatprep.subr.mxu0 0.0
        %1285 = vmatpush1.msra.mxu0 0.0
        %1286 = vmatprep.subr.mxu0 0.0
        %1287 = vmatpush1.msra.mxu0 0.0
        %1288 = vmatprep.subr.mxu0 0.0
        %1289 = vmatpush1.msra.mxu0 0.0
        %1290 = vmatprep.subr.mxu0 0.0
        %1291 = vmatpush1.msra.mxu0 0.0
        %1292 = vmatprep.subr.mxu0 0.0
        %1293 = vmatpush1.msra.mxu0 0.0
        %1294 = vmatprep.subr.mxu0 0.0
        %1295 = vmatpush1.msra.mxu0 0.0
        %1296 = vmatprep.subr.mxu0 0.0
        %1297 = vmatpush1.msra.mxu0 0.0
        %1298 = vmatprep.subr.mxu0 0.0
        %1299 = vmatpush1.msra.mxu0 0.0
        %1300 = vmatprep.subr.mxu0 0.0
        %1301 = vmatpush1.msra.mxu0 0.0
        %1302 = vmatprep.subr.mxu0 %v920
        %1303 = vmatpush1.msra.mxu0 %v919
        %1304 = vmatprep.subr.mxu0 %v904
        %1305 = vmatpush1.msra.mxu0 %v903
        %1306 = vmatprep.subr.mxu0 0.0
        %1307 = vmatpush2.msra.mxu0 0.0
        %1308 = vmatprep.subr.mxu0 0.0
        %1309 = vmatpush2.msra.mxu0 0.0
        %1310 = vmatprep.subr.mxu0 0.0
        %1311 = vmatpush2.msra.mxu0 0.0
        %1312 = vmatprep.subr.mxu0 0.0
        %1313 = vmatpush2.msra.mxu0 0.0
        %1314 = vmatprep.subr.mxu0 0.0
        %1315 = vmatpush2.msra.mxu0 0.0
        %1316 = vmatprep.subr.mxu0 0.0
        %1317 = vmatpush2.msra.mxu0 0.0
        %1318 = vmatprep.subr.mxu0 0.0
        %1319 = vmatpush2.msra.mxu0 0.0
        %1320 = vmatprep.subr.mxu0 0.0
        %1321 = vmatpush2.msra.mxu0 0.0
        %1322 = vmatprep.subr.mxu0 0.0
        %1323 = vmatpush2.msra.mxu0 0.0
        %1324 = vmatprep.subr.mxu0 0.0
        %1325 = vmatpush2.msra.mxu0 0.0
        %1326 = vmatprep.subr.mxu0 0.0
        %1327 = vmatpush2.msra.mxu0 0.0
        %1328 = vmatprep.subr.mxu0 0.0
        %1329 = vmatpush2.msra.mxu0 0.0
        %1330 = vmatprep.subr.mxu0 0.0
        %1331 = vmatpush2.msra.mxu0 0.0
        %1332 = vmatprep.subr.mxu0 0.0
        %1333 = vmatpush2.msra.mxu0 0.0
        %1334 = vmatprep.subr.mxu0 0.0
        %1335 = vmatpush2.msra.mxu0 0.0
        %1336 = vmatprep.subr.mxu0 0.0
        %1337 = vmatpush2.msra.mxu0 0.0
        %1338 = vmatprep.mubr.f32.mxu0 0.0
        %1339 = vmatmul.mubr.f32.gmra.mxu0 %v961
        %v1340 = vpop.f32.mrf.mxu0
        %v1341 = vadd.f32 %v888, %v1340
        %v1342 = vpop.f32.mrf.mxu0
        %v1343 = vadd.f32 %v888, %v1342
        %1344 = vmatprep.mubr.f32.mxu0 0.0
        %1345 = vmatmul.mubr.f32.gmra.mxu0 %v964
        %v1346 = vpop.f32.mrf.mxu0
        %v1347 = vadd.f32 %v893, %v1346
        %v1348 = vpop.f32.mrf.mxu0
        %v1349 = vadd.f32 %v893, %v1348
        %1350 = vdwg.mxu0
        %1351 = vmatprep.subr.mxu0 0.0
        %1352 = vmatpush1.msra.mxu0 0.0
        %1353 = vmatprep.subr.mxu0 0.0
        %1354 = vmatpush1.msra.mxu0 0.0
        %1355 = vmatprep.subr.mxu0 0.0
        %1356 = vmatpush1.msra.mxu0 0.0
        %1357 = vmatprep.subr.mxu0 0.0
        %1358 = vmatpush1.msra.mxu0 0.0
        %1359 = vmatprep.subr.mxu0 0.0
        %1360 = vmatpush1.msra.mxu0 0.0
        %1361 = vmatprep.subr.mxu0 0.0
        %1362 = vmatpush1.msra.mxu0 0.0
        %1363 = vmatprep.subr.mxu0 0.0
        %1364 = vmatpush1.msra.mxu0 0.0
        %1365 = vmatprep.subr.mxu0 0.0
        %1366 = vmatpush1.msra.mxu0 0.0
        %1367 = vmatprep.subr.mxu0 0.0
        %1368 = vmatpush1.msra.mxu0 0.0
        %1369 = vmatprep.subr.mxu0 0.0
        %1370 = vmatpush1.msra.mxu0 0.0
        %1371 = vmatprep.subr.mxu0 0.0
        %1372 = vmatpush1.msra.mxu0 0.0
        %1373 = vmatprep.subr.mxu0 0.0
        %1374 = vmatpush1.msra.mxu0 0.0
        %1375 = vmatprep.subr.mxu0 0.0
        %1376 = vmatpush1.msra.mxu0 0.0
        %1377 = vmatprep.subr.mxu0 0.0
        %1378 = vmatpush1.msra.mxu0 0.0
        %1379 = vmatprep.subr.mxu0 %v922
        %1380 = vmatpush1.msra.mxu0 %v921
        %1381 = vmatprep.subr.mxu0 %v906
        %1382 = vmatpush1.msra.mxu0 %v905
        %1383 = vmatprep.subr.mxu0 0.0
        %1384 = vmatpush2.msra.mxu0 0.0
        %1385 = vmatprep.subr.mxu0 0.0
        %1386 = vmatpush2.msra.mxu0 0.0
        %1387 = vmatprep.subr.mxu0 0.0
        %1388 = vmatpush2.msra.mxu0 0.0
        %1389 = vmatprep.subr.mxu0 0.0
        %1390 = vmatpush2.msra.mxu0 0.0
        %1391 = vmatprep.subr.mxu0 0.0
        %1392 = vmatpush2.msra.mxu0 0.0
        %1393 = vmatprep.subr.mxu0 0.0
        %1394 = vmatpush2.msra.mxu0 0.0
        %1395 = vmatprep.subr.mxu0 0.0
        %1396 = vmatpush2.msra.mxu0 0.0
        %1397 = vmatprep.subr.mxu0 0.0
        %1398 = vmatpush2.msra.mxu0 0.0
        %1399 = vmatprep.subr.mxu0 0.0
        %1400 = vmatpush2.msra.mxu0 0.0
        %1401 = vmatprep.subr.mxu0 0.0
        %1402 = vmatpush2.msra.mxu0 0.0
        %1403 = vmatprep.subr.mxu0 0.0
        %1404 = vmatpush2.msra.mxu0 0.0
        %1405 = vmatprep.subr.mxu0 0.0
        %1406 = vmatpush2.msra.mxu0 0.0
        %1407 = vmatprep.subr.mxu0 0.0
        %1408 = vmatpush2.msra.mxu0 0.0
        %1409 = vmatprep.subr.mxu0 0.0
        %1410 = vmatpush2.msra.mxu0 0.0
        %1411 = vmatprep.subr.mxu0 0.0
        %1412 = vmatpush2.msra.mxu0 0.0
        %1413 = vmatprep.subr.mxu0 0.0
        %1414 = vmatpush2.msra.mxu0 0.0
        %1415 = vmatprep.mubr.f32.mxu0 0.0
        %1416 = vmatmul.mubr.f32.gmra.mxu0 %v961
        %v1417 = vpop.f32.mrf.mxu0
        %v1418 = vadd.f32 %v888, %v1417
        %v1419 = vpop.f32.mrf.mxu0
        %v1420 = vadd.f32 %v888, %v1419
        %1421 = vmatprep.mubr.f32.mxu0 0.0
        %1422 = vmatmul.mubr.f32.gmra.mxu0 %v964
        %v1423 = vpop.f32.mrf.mxu0
        %v1424 = vadd.f32 %v893, %v1423
        %v1425 = vpop.f32.mrf.mxu0
        %v1426 = vadd.f32 %v893, %v1425
        %1427 = vdwg.mxu0
        %1428 = vmatprep.subr.mxu0 0.0
        %1429 = vmatpush1.msra.mxu0 0.0
        %1430 = vmatprep.subr.mxu0 0.0
        %1431 = vmatpush1.msra.mxu0 0.0
        %1432 = vmatprep.subr.mxu0 0.0
        %1433 = vmatpush1.msra.mxu0 0.0
        %1434 = vmatprep.subr.mxu0 0.0
        %1435 = vmatpush1.msra.mxu0 0.0
        %1436 = vmatprep.subr.mxu0 0.0
        %1437 = vmatpush1.msra.mxu0 0.0
        %1438 = vmatprep.subr.mxu0 0.0
        %1439 = vmatpush1.msra.mxu0 0.0
        %1440 = vmatprep.subr.mxu0 0.0
        %1441 = vmatpush1.msra.mxu0 0.0
        %1442 = vmatprep.subr.mxu0 0.0
        %1443 = vmatpush1.msra.mxu0 0.0
        %1444 = vmatprep.subr.mxu0 0.0
        %1445 = vmatpush1.msra.mxu0 0.0
        %1446 = vmatprep.subr.mxu0 0.0
        %1447 = vmatpush1.msra.mxu0 0.0
        %1448 = vmatprep.subr.mxu0 0.0
        %1449 = vmatpush1.msra.mxu0 0.0
        %1450 = vmatprep.subr.mxu0 0.0
        %1451 = vmatpush1.msra.mxu0 0.0
        %1452 = vmatprep.subr.mxu0 0.0
        %1453 = vmatpush1.msra.mxu0 0.0
        %1454 = vmatprep.subr.mxu0 0.0
        %1455 = vmatpush1.msra.mxu0 0.0
        %1456 = vmatprep.subr.mxu0 %v924
        %1457 = vmatpush1.msra.mxu0 %v923
        %1458 = vmatprep.subr.mxu0 %v908
        %1459 = vmatpush1.msra.mxu0 %v907
        %1460 = vmatprep.subr.mxu0 0.0
        %1461 = vmatpush2.msra.mxu0 0.0
        %1462 = vmatprep.subr.mxu0 0.0
        %1463 = vmatpush2.msra.mxu0 0.0
        %1464 = vmatprep.subr.mxu0 0.0
        %1465 = vmatpush2.msra.mxu0 0.0
        %1466 = vmatprep.subr.mxu0 0.0
        %1467 = vmatpush2.msra.mxu0 0.0
        %1468 = vmatprep.subr.mxu0 0.0
        %1469 = vmatpush2.msra.mxu0 0.0
        %1470 = vmatprep.subr.mxu0 0.0
        %1471 = vmatpush2.msra.mxu0 0.0
        %1472 = vmatprep.subr.mxu0 0.0
        %1473 = vmatpush2.msra.mxu0 0.0
        %1474 = vmatprep.subr.mxu0 0.0
        %1475 = vmatpush2.msra.mxu0 0.0
        %1476 = vmatprep.subr.mxu0 0.0
        %1477 = vmatpush2.msra.mxu0 0.0
        %1478 = vmatprep.subr.mxu0 0.0
        %1479 = vmatpush2.msra.mxu0 0.0
        %1480 = vmatprep.subr.mxu0 0.0
        %1481 = vmatpush2.msra.mxu0 0.0
        %1482 = vmatprep.subr.mxu0 0.0
        %1483 = vmatpush2.msra.mxu0 0.0
        %1484 = vmatprep.subr.mxu0 0.0
        %1485 = vmatpush2.msra.mxu0 0.0
        %1486 = vmatprep.subr.mxu0 0.0
        %1487 = vmatpush2.msra.mxu0 0.0
        %1488 = vmatprep.subr.mxu0 0.0
        %1489 = vmatpush2.msra.mxu0 0.0
        %1490 = vmatprep.subr.mxu0 0.0
        %1491 = vmatpush2.msra.mxu0 0.0
        %1492 = vmatprep.mubr.f32.mxu0 0.0
        %1493 = vmatmul.mubr.f32.gmra.mxu0 %v961
        %v1494 = vpop.f32.mrf.mxu0
        %v1495 = vadd.f32 %v888, %v1494
        %v1496 = vpop.f32.mrf.mxu0
        %v1497 = vadd.f32 %v888, %v1496
        %1498 = vmatprep.mubr.f32.mxu0 0.0
        %1499 = vmatmul.mubr.f32.gmra.mxu0 %v964
        %v1500 = vpop.f32.mrf.mxu0
        %v1501 = vadd.f32 %v893, %v1500
        %v1502 = vpop.f32.mrf.mxu0
        %v1503 = vadd.f32 %v893, %v1502
        %1504 = vdwg.mxu0
        %1505 = vmatprep.subr.mxu0 0.0
        %1506 = vmatpush1.msra.mxu0 0.0
        %1507 = vmatprep.subr.mxu0 0.0
        %1508 = vmatpush1.msra.mxu0 0.0
        %1509 = vmatprep.subr.mxu0 0.0
        %1510 = vmatpush1.msra.mxu0 0.0
        %1511 = vmatprep.subr.mxu0 0.0
        %1512 = vmatpush1.msra.mxu0 0.0
        %1513 = vmatprep.subr.mxu0 0.0
        %1514 = vmatpush1.msra.mxu0 0.0
        %1515 = vmatprep.subr.mxu0 0.0
        %1516 = vmatpush1.msra.mxu0 0.0
        %1517 = vmatprep.subr.mxu0 0.0
        %1518 = vmatpush1.msra.mxu0 0.0
        %1519 = vmatprep.subr.mxu0 0.0
        %1520 = vmatpush1.msra.mxu0 0.0
        %1521 = vmatprep.subr.mxu0 0.0
        %1522 = vmatpush1.msra.mxu0 0.0
        %1523 = vmatprep.subr.mxu0 0.0
        %1524 = vmatpush1.msra.mxu0 0.0
        %1525 = vmatprep.subr.mxu0 0.0
        %1526 = vmatpush1.msra.mxu0 0.0
        %1527 = vmatprep.subr.mxu0 0.0
        %1528 = vmatpush1.msra.mxu0 0.0
        %1529 = vmatprep.subr.mxu0 0.0
        %1530 = vmatpush1.msra.mxu0 0.0
        %1531 = vmatprep.subr.mxu0 0.0
        %1532 = vmatpush1.msra.mxu0 0.0
        %1533 = vmatprep.subr.mxu0 %v926
        %1534 = vmatpush1.msra.mxu0 %v925
        %1535 = vmatprep.subr.mxu0 %v910
        %1536 = vmatpush1.msra.mxu0 %v909
        %1537 = vmatprep.subr.mxu0 0.0
        %1538 = vmatpush2.msra.mxu0 0.0
        %1539 = vmatprep.subr.mxu0 0.0
        %1540 = vmatpush2.msra.mxu0 0.0
        %1541 = vmatprep.subr.mxu0 0.0
        %1542 = vmatpush2.msra.mxu0 0.0
        %1543 = vmatprep.subr.mxu0 0.0
        %1544 = vmatpush2.msra.mxu0 0.0
        %1545 = vmatprep.subr.mxu0 0.0
        %1546 = vmatpush2.msra.mxu0 0.0
        %1547 = vmatprep.subr.mxu0 0.0
        %1548 = vmatpush2.msra.mxu0 0.0
        %1549 = vmatprep.subr.mxu0 0.0
        %1550 = vmatpush2.msra.mxu0 0.0
        %1551 = vmatprep.subr.mxu0 0.0
        %1552 = vmatpush2.msra.mxu0 0.0
        %1553 = vmatprep.subr.mxu0 0.0
        %1554 = vmatpush2.msra.mxu0 0.0
        %1555 = vmatprep.subr.mxu0 0.0
        %1556 = vmatpush2.msra.mxu0 0.0
        %1557 = vmatprep.subr.mxu0 0.0
        %1558 = vmatpush2.msra.mxu0 0.0
        %1559 = vmatprep.subr.mxu0 0.0
        %1560 = vmatpush2.msra.mxu0 0.0
        %1561 = vmatprep.subr.mxu0 0.0
        %1562 = vmatpush2.msra.mxu0 0.0
        %1563 = vmatprep.subr.mxu0 0.0
        %1564 = vmatpush2.msra.mxu0 0.0
        %1565 = vmatprep.subr.mxu0 0.0
        %1566 = vmatpush2.msra.mxu0 0.0
        %1567 = vmatprep.subr.mxu0 0.0
        %1568 = vmatpush2.msra.mxu0 0.0
        %1569 = vmatprep.mubr.f32.mxu0 0.0
        %1570 = vmatmul.mubr.f32.gmra.mxu0 %v961
        %v1571 = vpop.f32.mrf.mxu0
        %v1572 = vadd.f32 %v888, %v1571
        %v1573 = vpop.f32.mrf.mxu0
        %v1574 = vadd.f32 %v888, %v1573
        %1575 = vmatprep.mubr.f32.mxu0 0.0
        %1576 = vmatmul.mubr.f32.gmra.mxu0 %v964
        %v1577 = vpop.f32.mrf.mxu0
        %v1578 = vadd.f32 %v893, %v1577
        %v1579 = vpop.f32.mrf.mxu0
        %v1580 = vadd.f32 %v893, %v1579
        %1581 = vdwg.mxu0
        %v1582 = vmax.f32 %v1033, 0.0
        %v1583 = vmax.f32 %v1035, 0.0
        %v1584 = vmax.f32 %v1110, 0.0
        %v1585 = vmax.f32 %v1112, 0.0
        %v1586 = vmax.f32 %v1187, 0.0
        %v1587 = vmax.f32 %v1189, 0.0
        %v1588 = vmax.f32 %v1264, 0.0
        %v1589 = vmax.f32 %v1266, 0.0
        %v1590 = vmax.f32 %v1341, 0.0
        %v1591 = vmax.f32 %v1343, 0.0
        %v1592 = vmax.f32 %v1418, 0.0
        %v1593 = vmax.f32 %v1420, 0.0
        %v1594 = vmax.f32 %v1495, 0.0
        %v1595 = vmax.f32 %v1497, 0.0
        %v1596 = vmax.f32 %v1572, 0.0
        %v1597 = vmax.f32 %v1574, 0.0
        %v1598 = vmax.f32 %v1039, 0.0
        %v1599 = vmax.f32 %v1041, 0.0
        %v1600 = vmax.f32 %v1116, 0.0
        %v1601 = vmax.f32 %v1118, 0.0
        %v1602 = vmax.f32 %v1193, 0.0
        %v1603 = vmax.f32 %v1195, 0.0
        %v1604 = vmax.f32 %v1270, 0.0
        %v1605 = vmax.f32 %v1272, 0.0
        %v1606 = vmax.f32 %v1347, 0.0
        %v1607 = vmax.f32 %v1349, 0.0
        %v1608 = vmax.f32 %v1424, 0.0
        %v1609 = vmax.f32 %v1426, 0.0
        %v1610 = vmax.f32 %v1501, 0.0
        %v1611 = vmax.f32 %v1503, 0.0
        %v1612 = vmax.f32 %v1578, 0.0
        %v1613 = vmax.f32 %v1580, 0.0
        %v1614 = vadd.f32 %v1598, %v1599
        %v1615 = vadd.f32 %v1614, %v1600
        %v1616 = vadd.f32 %v1615, %v1601
        %v1617 = vadd.f32 %v1616, %v1602
        %v1618 = vadd.f32 %v1617, %v1603
        %v1619 = vadd.f32 %v1618, %v1604
        %v1620 = vadd.f32 %v1619, %v1605
        %v1621 = vadd.f32 %v1620, %v1606
        %v1622 = vadd.f32 %v1621, %v1607
        %v1623 = vadd.f32 %v1622, %v1608
        %v1624 = vadd.f32 %v1623, %v1609
        %v1625 = vadd.f32 %v1624, %v1610
        %v1626 = vadd.f32 %v1625, %v1611
        %v1627 = vadd.f32 %v1626, %v1612
        %v1628 = vadd.f32 %v1627, %v1613
        %v1629 = vld [vmem:[%s3] sm:$0xff]
        %v1630 = vld [vmem:[%s4] sm:$0xff]
        %v1647 = vcombine.low %v1582, %v1583
        %v1648 = vcombine.high %v1582, %v1583
        %v1649 = vcombine.low %v1584, %v1585
        %v1650 = vcombine.high %v1584, %v1585
        %v1651 = vcombine.low %v1586, %v1587
        %v1652 = vcombine.high %v1586, %v1587
        %v1653 = vcombine.low %v1588, %v1589
        %v1654 = vcombine.high %v1588, %v1589
        %v1656 = vunpack.c.l.s4 1966171168
        %v1657 = vunpack.c.0.s8 %v1656
        %v1658 = vlaneseq
        %v1659 = vshrl.u32 %v1658, 7
        %v1660 = vsub.s32 %v1657, %v1659
        %v1661 = vrot.slane %v1647, %v1660
        %v1663 = vunpack.c.l.s4 1966171168
        %v1664 = vunpack.c.0.s8 %v1663
        %v1665 = vlaneseq
        %v1666 = vshrl.u32 %v1665, 7
        %v1667 = vsub.s32 %v1664, %v1666
        %v1668 = vrot.slane %v1648, %v1667
        %v1670 = vunpack.c.l.s4 1966171168
        %v1671 = vunpack.c.0.s8 %v1670
        %v1672 = vlaneseq
        %v1673 = vshrl.u32 %v1672, 7
        %v1674 = vsub.s32 %v1671, %v1673
        %v1675 = vrot.slane %v1649, %v1674
        %v1677 = vunpack.c.l.s4 1966171168
        %v1678 = vunpack.c.0.s8 %v1677
        %v1679 = vlaneseq
        %v1680 = vshrl.u32 %v1679, 7
        %v1681 = vsub.s32 %v1678, %v1680
        %v1682 = vrot.slane %v1650, %v1681
        %v1684 = vunpack.c.l.s4 1966171168
        %v1685 = vunpack.c.0.s8 %v1684
        %v1686 = vlaneseq
        %v1687 = vshrl.u32 %v1686, 7
        %v1688 = vsub.s32 %v1685, %v1687
        %v1689 = vrot.slane %v1651, %v1688
        %v1691 = vunpack.c.l.s4 1966171168
        %v1692 = vunpack.c.0.s8 %v1691
        %v1693 = vlaneseq
        %v1694 = vshrl.u32 %v1693, 7
        %v1695 = vsub.s32 %v1692, %v1694
        %v1696 = vrot.slane %v1652, %v1695
        %v1698 = vunpack.c.l.s4 1966171168
        %v1699 = vunpack.c.0.s8 %v1698
        %v1700 = vlaneseq
        %v1701 = vshrl.u32 %v1700, 7
        %v1702 = vsub.s32 %v1699, %v1701
        %v1703 = vrot.slane %v1653, %v1702
        %v1705 = vunpack.c.l.s4 1966171168
        %v1706 = vunpack.c.0.s8 %v1705
        %v1707 = vlaneseq
        %v1708 = vshrl.u32 %v1707, 7
        %v1709 = vsub.s32 %v1706, %v1708
        %v1710 = vrot.slane %v1654, %v1709
        %v1711 = vcombine.low %v1661, %v1675
        %v1712 = vcombine.high %v1661, %v1675
        %v1713 = vcombine.low %v1668, %v1682
        %v1714 = vcombine.high %v1668, %v1682
        %v1715 = vcombine.low %v1689, %v1703
        %v1716 = vcombine.high %v1689, %v1703
        %v1717 = vcombine.low %v1696, %v1710
        %v1718 = vcombine.high %v1696, %v1710
        %v1720 = vunpack.c.l.s4 1966171168
        %v1721 = vunpack.c.0.s8 %v1720
        %v1722 = vlaneseq
        %v1723 = vshrl.u32 %v1722, 7
        %v1724 = vsub.s32 %v1721, %v1723
        %v1725 = vrot.slane %v1711, %v1724
        %v1727 = vunpack.c.l.s4 1966171168
        %v1728 = vunpack.c.0.s8 %v1727
        %v1729 = vlaneseq
        %v1730 = vshrl.u32 %v1729, 7
        %v1731 = vsub.s32 %v1728, %v1730
        %v1732 = vrot.slane %v1713, %v1731
        %v1734 = vunpack.c.l.s4 1966171168
        %v1735 = vunpack.c.0.s8 %v1734
        %v1736 = vlaneseq
        %v1737 = vshrl.u32 %v1736, 7
        %v1738 = vsub.s32 %v1735, %v1737
        %v1739 = vrot.slane %v1712, %v1738
        %v1741 = vunpack.c.l.s4 1966171168
        %v1742 = vunpack.c.0.s8 %v1741
        %v1743 = vlaneseq
        %v1744 = vshrl.u32 %v1743, 7
        %v1745 = vsub.s32 %v1742, %v1744
        %v1746 = vrot.slane %v1714, %v1745
        %v1748 = vunpack.c.l.s4 1966171168
        %v1749 = vunpack.c.0.s8 %v1748
        %v1750 = vlaneseq
        %v1751 = vshrl.u32 %v1750, 7
        %v1752 = vsub.s32 %v1749, %v1751
        %v1753 = vrot.slane %v1715, %v1752
        %v1755 = vunpack.c.l.s4 1966171168
        %v1756 = vunpack.c.0.s8 %v1755
        %v1757 = vlaneseq
        %v1758 = vshrl.u32 %v1757, 7
        %v1759 = vsub.s32 %v1756, %v1758
        %v1760 = vrot.slane %v1717, %v1759
        %v1762 = vunpack.c.l.s4 1966171168
        %v1763 = vunpack.c.0.s8 %v1762
        %v1764 = vlaneseq
        %v1765 = vshrl.u32 %v1764, 7
        %v1766 = vsub.s32 %v1763, %v1765
        %v1767 = vrot.slane %v1716, %v1766
        %v1769 = vunpack.c.l.s4 1966171168
        %v1770 = vunpack.c.0.s8 %v1769
        %v1771 = vlaneseq
        %v1772 = vshrl.u32 %v1771, 7
        %v1773 = vsub.s32 %v1770, %v1772
        %v1774 = vrot.slane %v1718, %v1773
        %v1775 = vcombine.low %v1725, %v1753
        %v1776 = vcombine.high %v1725, %v1753
        %v1777 = vcombine.low %v1732, %v1760
        %v1778 = vcombine.high %v1732, %v1760
        %v1779 = vcombine.low %v1739, %v1767
        %v1780 = vcombine.high %v1739, %v1767
        %v1781 = vcombine.low %v1746, %v1774
        %v1782 = vcombine.high %v1746, %v1774
        %v1783 = vcombine.low %v1590, %v1591
        %v1784 = vcombine.high %v1590, %v1591
        %v1785 = vcombine.low %v1592, %v1593
        %v1786 = vcombine.high %v1592, %v1593
        %v1787 = vcombine.low %v1594, %v1595
        %v1788 = vcombine.high %v1594, %v1595
        %v1789 = vcombine.low %v1596, %v1597
        %v1790 = vcombine.high %v1596, %v1597
        %v1792 = vunpack.c.l.s4 1966171168
        %v1793 = vunpack.c.0.s8 %v1792
        %v1794 = vlaneseq
        %v1795 = vshrl.u32 %v1794, 7
        %v1796 = vsub.s32 %v1793, %v1795
        %v1797 = vrot.slane %v1783, %v1796
        %v1799 = vunpack.c.l.s4 1966171168
        %v1800 = vunpack.c.0.s8 %v1799
        %v1801 = vlaneseq
        %v1802 = vshrl.u32 %v1801, 7
        %v1803 = vsub.s32 %v1800, %v1802
        %v1804 = vrot.slane %v1784, %v1803
        %v1806 = vunpack.c.l.s4 1966171168
        %v1807 = vunpack.c.0.s8 %v1806
        %v1808 = vlaneseq
        %v1809 = vshrl.u32 %v1808, 7
        %v1810 = vsub.s32 %v1807, %v1809
        %v1811 = vrot.slane %v1785, %v1810
        %v1813 = vunpack.c.l.s4 1966171168
        %v1814 = vunpack.c.0.s8 %v1813
        %v1815 = vlaneseq
        %v1816 = vshrl.u32 %v1815, 7
        %v1817 = vsub.s32 %v1814, %v1816
        %v1818 = vrot.slane %v1786, %v1817
        %v1820 = vunpack.c.l.s4 1966171168
        %v1821 = vunpack.c.0.s8 %v1820
        %v1822 = vlaneseq
        %v1823 = vshrl.u32 %v1822, 7
        %v1824 = vsub.s32 %v1821, %v1823
        %v1825 = vrot.slane %v1787, %v1824
        %v1827 = vunpack.c.l.s4 1966171168
        %v1828 = vunpack.c.0.s8 %v1827
        %v1829 = vlaneseq
        %v1830 = vshrl.u32 %v1829, 7
        %v1831 = vsub.s32 %v1828, %v1830
        %v1832 = vrot.slane %v1788, %v1831
        %v1834 = vunpack.c.l.s4 1966171168
        %v1835 = vunpack.c.0.s8 %v1834
        %v1836 = vlaneseq
        %v1837 = vshrl.u32 %v1836, 7
        %v1838 = vsub.s32 %v1835, %v1837
        %v1839 = vrot.slane %v1789, %v1838
        %v1841 = vunpack.c.l.s4 1966171168
        %v1842 = vunpack.c.0.s8 %v1841
        %v1843 = vlaneseq
        %v1844 = vshrl.u32 %v1843, 7
        %v1845 = vsub.s32 %v1842, %v1844
        %v1846 = vrot.slane %v1790, %v1845
        %v1847 = vcombine.low %v1797, %v1811
        %v1848 = vcombine.high %v1797, %v1811
        %v1849 = vcombine.low %v1804, %v1818
        %v1850 = vcombine.high %v1804, %v1818
        %v1851 = vcombine.low %v1825, %v1839
        %v1852 = vcombine.high %v1825, %v1839
        %v1853 = vcombine.low %v1832, %v1846
        %v1854 = vcombine.high %v1832, %v1846
        %v1856 = vunpack.c.l.s4 1966171168
        %v1857 = vunpack.c.0.s8 %v1856
        %v1858 = vlaneseq
        %v1859 = vshrl.u32 %v1858, 7
        %v1860 = vsub.s32 %v1857, %v1859
        %v1861 = vrot.slane %v1847, %v1860
        %v1863 = vunpack.c.l.s4 1966171168
        %v1864 = vunpack.c.0.s8 %v1863
        %v1865 = vlaneseq
        %v1866 = vshrl.u32 %v1865, 7
        %v1867 = vsub.s32 %v1864, %v1866
        %v1868 = vrot.slane %v1849, %v1867
        %v1870 = vunpack.c.l.s4 1966171168
        %v1871 = vunpack.c.0.s8 %v1870
        %v1872 = vlaneseq
        %v1873 = vshrl.u32 %v1872, 7
        %v1874 = vsub.s32 %v1871, %v1873
        %v1875 = vrot.slane %v1848, %v1874
        %v1877 = vunpack.c.l.s4 1966171168
        %v1878 = vunpack.c.0.s8 %v1877
        %v1879 = vlaneseq
        %v1880 = vshrl.u32 %v1879, 7
        %v1881 = vsub.s32 %v1878, %v1880
        %v1882 = vrot.slane %v1850, %v1881
        %v1884 = vunpack.c.l.s4 1966171168
        %v1885 = vunpack.c.0.s8 %v1884
        %v1886 = vlaneseq
        %v1887 = vshrl.u32 %v1886, 7
        %v1888 = vsub.s32 %v1885, %v1887
        %v1889 = vrot.slane %v1851, %v1888
        %v1891 = vunpack.c.l.s4 1966171168
        %v1892 = vunpack.c.0.s8 %v1891
        %v1893 = vlaneseq
        %v1894 = vshrl.u32 %v1893, 7
        %v1895 = vsub.s32 %v1892, %v1894
        %v1896 = vrot.slane %v1853, %v1895
        %v1898 = vunpack.c.l.s4 1966171168
        %v1899 = vunpack.c.0.s8 %v1898
        %v1900 = vlaneseq
        %v1901 = vshrl.u32 %v1900, 7
        %v1902 = vsub.s32 %v1899, %v1901
        %v1903 = vrot.slane %v1852, %v1902
        %v1905 = vunpack.c.l.s4 1966171168
        %v1906 = vunpack.c.0.s8 %v1905
        %v1907 = vlaneseq
        %v1908 = vshrl.u32 %v1907, 7
        %v1909 = vsub.s32 %v1906, %v1908
        %v1910 = vrot.slane %v1854, %v1909
        %v1911 = vcombine.low %v1861, %v1889
        %v1912 = vcombine.high %v1861, %v1889
        %v1913 = vcombine.low %v1868, %v1896
        %v1914 = vcombine.high %v1868, %v1896
        %v1915 = vcombine.low %v1875, %v1903
        %v1916 = vcombine.high %v1875, %v1903
        %v1917 = vcombine.low %v1882, %v1910
        %v1918 = vcombine.high %v1882, %v1910
        %v1919 = vlaneseq
        %v1920 = vshrl.u32 %v1919, 7
        %v1921 = vsub.s32 0, %v1920
        %v1922 = vrot.slane %v1775, %v1921
        %v1923 = vlaneseq
        %v1924 = vshrl.u32 %v1923, 7
        %v1925 = vsub.s32 1, %v1924
        %v1926 = vrot.slane %v1775, %v1925
        %v1927 = vlaneseq
        %v1928 = vshrl.u32 %v1927, 7
        %v1929 = vsub.s32 2, %v1928
        %v1930 = vrot.slane %v1775, %v1929
        %v1931 = vlaneseq
        %v1932 = vshrl.u32 %v1931, 7
        %v1933 = vsub.s32 3, %v1932
        %v1934 = vrot.slane %v1775, %v1933
        %v1935 = vlaneseq
        %v1936 = vshrl.u32 %v1935, 7
        %v1937 = vsub.s32 4, %v1936
        %v1938 = vrot.slane %v1775, %v1937
        %v1939 = vlaneseq
        %v1940 = vshrl.u32 %v1939, 7
        %v1941 = vsub.s32 5, %v1940
        %v1942 = vrot.slane %v1775, %v1941
        %v1943 = vlaneseq
        %v1944 = vshrl.u32 %v1943, 7
        %v1945 = vsub.s32 6, %v1944
        %v1946 = vrot.slane %v1775, %v1945
        %v1947 = vlaneseq
        %v1948 = vshrl.u32 %v1947, 7
        %v1949 = vsub.s32 7, %v1948
        %v1950 = vrot.slane %v1775, %v1949
        %v1951 = vlaneseq
        %v1952 = vshrl.u32 %v1951, 7
        %v1953 = vsub.s32 0, %v1952
        %v1954 = vrot.slane %v1911, %v1953
        %v1955 = vlaneseq
        %v1956 = vshrl.u32 %v1955, 7
        %v1957 = vsub.s32 1, %v1956
        %v1958 = vrot.slane %v1911, %v1957
        %v1959 = vlaneseq
        %v1960 = vshrl.u32 %v1959, 7
        %v1961 = vsub.s32 2, %v1960
        %v1962 = vrot.slane %v1911, %v1961
        %v1963 = vlaneseq
        %v1964 = vshrl.u32 %v1963, 7
        %v1965 = vsub.s32 3, %v1964
        %v1966 = vrot.slane %v1911, %v1965
        %v1967 = vlaneseq
        %v1968 = vshrl.u32 %v1967, 7
        %v1969 = vsub.s32 4, %v1968
        %v1970 = vrot.slane %v1911, %v1969
        %v1971 = vlaneseq
        %v1972 = vshrl.u32 %v1971, 7
        %v1973 = vsub.s32 5, %v1972
        %v1974 = vrot.slane %v1911, %v1973
        %v1975 = vlaneseq
        %v1976 = vshrl.u32 %v1975, 7
        %v1977 = vsub.s32 6, %v1976
        %v1978 = vrot.slane %v1911, %v1977
        %v1979 = vlaneseq
        %v1980 = vshrl.u32 %v1979, 7
        %v1981 = vsub.s32 7, %v1980
        %v1982 = vrot.slane %v1911, %v1981
        %v1983 = vlaneseq
        %v1984 = vshrl.u32 %v1983, 7
        %v1985 = vsub.s32 0, %v1984
        %v1986 = vrot.slane %v1779, %v1985
        %v1987 = vlaneseq
        %v1988 = vshrl.u32 %v1987, 7
        %v1989 = vsub.s32 1, %v1988
        %v1990 = vrot.slane %v1779, %v1989
        %v1991 = vlaneseq
        %v1992 = vshrl.u32 %v1991, 7
        %v1993 = vsub.s32 2, %v1992
        %v1994 = vrot.slane %v1779, %v1993
        %v1995 = vlaneseq
        %v1996 = vshrl.u32 %v1995, 7
        %v1997 = vsub.s32 3, %v1996
        %v1998 = vrot.slane %v1779, %v1997
        %v1999 = vlaneseq
        %v2000 = vshrl.u32 %v1999, 7
        %v2001 = vsub.s32 4, %v2000
        %v2002 = vrot.slane %v1779, %v2001
        %v2003 = vlaneseq
        %v2004 = vshrl.u32 %v2003, 7
        %v2005 = vsub.s32 5, %v2004
        %v2006 = vrot.slane %v1779, %v2005
        %v2007 = vlaneseq
        %v2008 = vshrl.u32 %v2007, 7
        %v2009 = vsub.s32 6, %v2008
        %v2010 = vrot.slane %v1779, %v2009
        %v2011 = vlaneseq
        %v2012 = vshrl.u32 %v2011, 7
        %v2013 = vsub.s32 7, %v2012
        %v2014 = vrot.slane %v1779, %v2013
        %v2015 = vlaneseq
        %v2016 = vshrl.u32 %v2015, 7
        %v2017 = vsub.s32 0, %v2016
        %v2018 = vrot.slane %v1915, %v2017
        %v2019 = vlaneseq
        %v2020 = vshrl.u32 %v2019, 7
        %v2021 = vsub.s32 1, %v2020
        %v2022 = vrot.slane %v1915, %v2021
        %v2023 = vlaneseq
        %v2024 = vshrl.u32 %v2023, 7
        %v2025 = vsub.s32 2, %v2024
        %v2026 = vrot.slane %v1915, %v2025
        %v2027 = vlaneseq
        %v2028 = vshrl.u32 %v2027, 7
        %v2029 = vsub.s32 3, %v2028
        %v2030 = vrot.slane %v1915, %v2029
        %v2031 = vlaneseq
        %v2032 = vshrl.u32 %v2031, 7
        %v2033 = vsub.s32 4, %v2032
        %v2034 = vrot.slane %v1915, %v2033
        %v2035 = vlaneseq
        %v2036 = vshrl.u32 %v2035, 7
        %v2037 = vsub.s32 5, %v2036
        %v2038 = vrot.slane %v1915, %v2037
        %v2039 = vlaneseq
        %v2040 = vshrl.u32 %v2039, 7
        %v2041 = vsub.s32 6, %v2040
        %v2042 = vrot.slane %v1915, %v2041
        %v2043 = vlaneseq
        %v2044 = vshrl.u32 %v2043, 7
        %v2045 = vsub.s32 7, %v2044
        %v2046 = vrot.slane %v1915, %v2045
        %v2047 = vlaneseq
        %v2048 = vshrl.u32 %v2047, 7
        %v2049 = vsub.s32 0, %v2048
        %v2050 = vrot.slane %v1776, %v2049
        %v2051 = vlaneseq
        %v2052 = vshrl.u32 %v2051, 7
        %v2053 = vsub.s32 1, %v2052
        %v2054 = vrot.slane %v1776, %v2053
        %v2055 = vlaneseq
        %v2056 = vshrl.u32 %v2055, 7
        %v2057 = vsub.s32 2, %v2056
        %v2058 = vrot.slane %v1776, %v2057
        %v2059 = vlaneseq
        %v2060 = vshrl.u32 %v2059, 7
        %v2061 = vsub.s32 3, %v2060
        %v2062 = vrot.slane %v1776, %v2061
        %v2063 = vlaneseq
        %v2064 = vshrl.u32 %v2063, 7
        %v2065 = vsub.s32 4, %v2064
        %v2066 = vrot.slane %v1776, %v2065
        %v2067 = vlaneseq
        %v2068 = vshrl.u32 %v2067, 7
        %v2069 = vsub.s32 5, %v2068
        %v2070 = vrot.slane %v1776, %v2069
        %v2071 = vlaneseq
        %v2072 = vshrl.u32 %v2071, 7
        %v2073 = vsub.s32 6, %v2072
        %v2074 = vrot.slane %v1776, %v2073
        %v2075 = vlaneseq
        %v2076 = vshrl.u32 %v2075, 7
        %v2077 = vsub.s32 7, %v2076
        %v2078 = vrot.slane %v1776, %v2077
        %v2079 = vlaneseq
        %v2080 = vshrl.u32 %v2079, 7
        %v2081 = vsub.s32 0, %v2080
        %v2082 = vrot.slane %v1912, %v2081
        %v2083 = vlaneseq
        %v2084 = vshrl.u32 %v2083, 7
        %v2085 = vsub.s32 1, %v2084
        %v2086 = vrot.slane %v1912, %v2085
        %v2087 = vlaneseq
        %v2088 = vshrl.u32 %v2087, 7
        %v2089 = vsub.s32 2, %v2088
        %v2090 = vrot.slane %v1912, %v2089
        %v2091 = vlaneseq
        %v2092 = vshrl.u32 %v2091, 7
        %v2093 = vsub.s32 3, %v2092
        %v2094 = vrot.slane %v1912, %v2093
        %v2095 = vlaneseq
        %v2096 = vshrl.u32 %v2095, 7
        %v2097 = vsub.s32 4, %v2096
        %v2098 = vrot.slane %v1912, %v2097
        %v2099 = vlaneseq
        %v2100 = vshrl.u32 %v2099, 7
        %v2101 = vsub.s32 5, %v2100
        %v2102 = vrot.slane %v1912, %v2101
        %v2103 = vlaneseq
        %v2104 = vshrl.u32 %v2103, 7
        %v2105 = vsub.s32 6, %v2104
        %v2106 = vrot.slane %v1912, %v2105
        %v2107 = vlaneseq
        %v2108 = vshrl.u32 %v2107, 7
        %v2109 = vsub.s32 7, %v2108
        %v2110 = vrot.slane %v1912, %v2109
        %v2111 = vlaneseq
        %v2112 = vshrl.u32 %v2111, 7
        %v2113 = vsub.s32 0, %v2112
        %v2114 = vrot.slane %v1780, %v2113
        %v2115 = vlaneseq
        %v2116 = vshrl.u32 %v2115, 7
        %v2117 = vsub.s32 1, %v2116
        %v2118 = vrot.slane %v1780, %v2117
        %v2119 = vlaneseq
        %v2120 = vshrl.u32 %v2119, 7
        %v2121 = vsub.s32 2, %v2120
        %v2122 = vrot.slane %v1780, %v2121
        %v2123 = vlaneseq
        %v2124 = vshrl.u32 %v2123, 7
        %v2125 = vsub.s32 3, %v2124
        %v2126 = vrot.slane %v1780, %v2125
        %v2127 = vlaneseq
        %v2128 = vshrl.u32 %v2127, 7
        %v2129 = vsub.s32 4, %v2128
        %v2130 = vrot.slane %v1780, %v2129
        %v2131 = vlaneseq
        %v2132 = vshrl.u32 %v2131, 7
        %v2133 = vsub.s32 5, %v2132
        %v2134 = vrot.slane %v1780, %v2133
        %v2135 = vlaneseq
        %v2136 = vshrl.u32 %v2135, 7
        %v2137 = vsub.s32 6, %v2136
        %v2138 = vrot.slane %v1780, %v2137
        %v2139 = vlaneseq
        %v2140 = vshrl.u32 %v2139, 7
        %v2141 = vsub.s32 7, %v2140
        %v2142 = vrot.slane %v1780, %v2141
        %v2143 = vlaneseq
        %v2144 = vshrl.u32 %v2143, 7
        %v2145 = vsub.s32 0, %v2144
        %v2146 = vrot.slane %v1916, %v2145
        %v2147 = vlaneseq
        %v2148 = vshrl.u32 %v2147, 7
        %v2149 = vsub.s32 1, %v2148
        %v2150 = vrot.slane %v1916, %v2149
        %v2151 = vlaneseq
        %v2152 = vshrl.u32 %v2151, 7
        %v2153 = vsub.s32 2, %v2152
        %v2154 = vrot.slane %v1916, %v2153
        %v2155 = vlaneseq
        %v2156 = vshrl.u32 %v2155, 7
        %v2157 = vsub.s32 3, %v2156
        %v2158 = vrot.slane %v1916, %v2157
        %v2159 = vlaneseq
        %v2160 = vshrl.u32 %v2159, 7
        %v2161 = vsub.s32 4, %v2160
        %v2162 = vrot.slane %v1916, %v2161
        %v2163 = vlaneseq
        %v2164 = vshrl.u32 %v2163, 7
        %v2165 = vsub.s32 5, %v2164
        %v2166 = vrot.slane %v1916, %v2165
        %v2167 = vlaneseq
        %v2168 = vshrl.u32 %v2167, 7
        %v2169 = vsub.s32 6, %v2168
        %v2170 = vrot.slane %v1916, %v2169
        %v2171 = vlaneseq
        %v2172 = vshrl.u32 %v2171, 7
        %v2173 = vsub.s32 7, %v2172
        %v2174 = vrot.slane %v1916, %v2173
        %v2175 = vlaneseq
        %v2176 = vshrl.u32 %v2175, 7
        %v2177 = vsub.s32 0, %v2176
        %v2178 = vrot.slane %v1777, %v2177
        %v2179 = vlaneseq
        %v2180 = vshrl.u32 %v2179, 7
        %v2181 = vsub.s32 1, %v2180
        %v2182 = vrot.slane %v1777, %v2181
        %v2183 = vlaneseq
        %v2184 = vshrl.u32 %v2183, 7
        %v2185 = vsub.s32 2, %v2184
        %v2186 = vrot.slane %v1777, %v2185
        %v2187 = vlaneseq
        %v2188 = vshrl.u32 %v2187, 7
        %v2189 = vsub.s32 3, %v2188
        %v2190 = vrot.slane %v1777, %v2189
        %v2191 = vlaneseq
        %v2192 = vshrl.u32 %v2191, 7
        %v2193 = vsub.s32 4, %v2192
        %v2194 = vrot.slane %v1777, %v2193
        %v2195 = vlaneseq
        %v2196 = vshrl.u32 %v2195, 7
        %v2197 = vsub.s32 5, %v2196
        %v2198 = vrot.slane %v1777, %v2197
        %v2199 = vlaneseq
        %v2200 = vshrl.u32 %v2199, 7
        %v2201 = vsub.s32 6, %v2200
        %v2202 = vrot.slane %v1777, %v2201
        %v2203 = vlaneseq
        %v2204 = vshrl.u32 %v2203, 7
        %v2205 = vsub.s32 7, %v2204
        %v2206 = vrot.slane %v1777, %v2205
        %v2207 = vlaneseq
        %v2208 = vshrl.u32 %v2207, 7
        %v2209 = vsub.s32 0, %v2208
        %v2210 = vrot.slane %v1913, %v2209
        %v2211 = vlaneseq
        %v2212 = vshrl.u32 %v2211, 7
        %v2213 = vsub.s32 1, %v2212
        %v2214 = vrot.slane %v1913, %v2213
        %v2215 = vlaneseq
        %v2216 = vshrl.u32 %v2215, 7
        %v2217 = vsub.s32 2, %v2216
        %v2218 = vrot.slane %v1913, %v2217
        %v2219 = vlaneseq
        %v2220 = vshrl.u32 %v2219, 7
        %v2221 = vsub.s32 3, %v2220
        %v2222 = vrot.slane %v1913, %v2221
        %v2223 = vlaneseq
        %v2224 = vshrl.u32 %v2223, 7
        %v2225 = vsub.s32 4, %v2224
        %v2226 = vrot.slane %v1913, %v2225
        %v2227 = vlaneseq
        %v2228 = vshrl.u32 %v2227, 7
        %v2229 = vsub.s32 5, %v2228
        %v2230 = vrot.slane %v1913, %v2229
        %v2231 = vlaneseq
        %v2232 = vshrl.u32 %v2231, 7
        %v2233 = vsub.s32 6, %v2232
        %v2234 = vrot.slane %v1913, %v2233
        %v2235 = vlaneseq
        %v2236 = vshrl.u32 %v2235, 7
        %v2237 = vsub.s32 7, %v2236
        %v2238 = vrot.slane %v1913, %v2237
        %v2239 = vlaneseq
        %v2240 = vshrl.u32 %v2239, 7
        %v2241 = vsub.s32 0, %v2240
        %v2242 = vrot.slane %v1781, %v2241
        %v2243 = vlaneseq
        %v2244 = vshrl.u32 %v2243, 7
        %v2245 = vsub.s32 1, %v2244
        %v2246 = vrot.slane %v1781, %v2245
        %v2247 = vlaneseq
        %v2248 = vshrl.u32 %v2247, 7
        %v2249 = vsub.s32 2, %v2248
        %v2250 = vrot.slane %v1781, %v2249
        %v2251 = vlaneseq
        %v2252 = vshrl.u32 %v2251, 7
        %v2253 = vsub.s32 3, %v2252
        %v2254 = vrot.slane %v1781, %v2253
        %v2255 = vlaneseq
        %v2256 = vshrl.u32 %v2255, 7
        %v2257 = vsub.s32 4, %v2256
        %v2258 = vrot.slane %v1781, %v2257
        %v2259 = vlaneseq
        %v2260 = vshrl.u32 %v2259, 7
        %v2261 = vsub.s32 5, %v2260
        %v2262 = vrot.slane %v1781, %v2261
        %v2263 = vlaneseq
        %v2264 = vshrl.u32 %v2263, 7
        %v2265 = vsub.s32 6, %v2264
        %v2266 = vrot.slane %v1781, %v2265
        %v2267 = vlaneseq
        %v2268 = vshrl.u32 %v2267, 7
        %v2269 = vsub.s32 7, %v2268
        %v2270 = vrot.slane %v1781, %v2269
        %v2271 = vlaneseq
        %v2272 = vshrl.u32 %v2271, 7
        %v2273 = vsub.s32 0, %v2272
        %v2274 = vrot.slane %v1917, %v2273
        %v2275 = vlaneseq
        %v2276 = vshrl.u32 %v2275, 7
        %v2277 = vsub.s32 1, %v2276
        %v2278 = vrot.slane %v1917, %v2277
        %v2279 = vlaneseq
        %v2280 = vshrl.u32 %v2279, 7
        %v2281 = vsub.s32 2, %v2280
        %v2282 = vrot.slane %v1917, %v2281
        %v2283 = vlaneseq
        %v2284 = vshrl.u32 %v2283, 7
        %v2285 = vsub.s32 3, %v2284
        %v2286 = vrot.slane %v1917, %v2285
        %v2287 = vlaneseq
        %v2288 = vshrl.u32 %v2287, 7
        %v2289 = vsub.s32 4, %v2288
        %v2290 = vrot.slane %v1917, %v2289
        %v2291 = vlaneseq
        %v2292 = vshrl.u32 %v2291, 7
        %v2293 = vsub.s32 5, %v2292
        %v2294 = vrot.slane %v1917, %v2293
        %v2295 = vlaneseq
        %v2296 = vshrl.u32 %v2295, 7
        %v2297 = vsub.s32 6, %v2296
        %v2298 = vrot.slane %v1917, %v2297
        %v2299 = vlaneseq
        %v2300 = vshrl.u32 %v2299, 7
        %v2301 = vsub.s32 7, %v2300
        %v2302 = vrot.slane %v1917, %v2301
        %v2303 = vlaneseq
        %v2304 = vshrl.u32 %v2303, 7
        %v2305 = vsub.s32 0, %v2304
        %v2306 = vrot.slane %v1778, %v2305
        %v2307 = vlaneseq
        %v2308 = vshrl.u32 %v2307, 7
        %v2309 = vsub.s32 1, %v2308
        %v2310 = vrot.slane %v1778, %v2309
        %v2311 = vlaneseq
        %v2312 = vshrl.u32 %v2311, 7
        %v2313 = vsub.s32 2, %v2312
        %v2314 = vrot.slane %v1778, %v2313
        %v2315 = vlaneseq
        %v2316 = vshrl.u32 %v2315, 7
        %v2317 = vsub.s32 3, %v2316
        %v2318 = vrot.slane %v1778, %v2317
        %v2319 = vlaneseq
        %v2320 = vshrl.u32 %v2319, 7
        %v2321 = vsub.s32 4, %v2320
        %v2322 = vrot.slane %v1778, %v2321
        %v2323 = vlaneseq
        %v2324 = vshrl.u32 %v2323, 7
        %v2325 = vsub.s32 5, %v2324
        %v2326 = vrot.slane %v1778, %v2325
        %v2327 = vlaneseq
        %v2328 = vshrl.u32 %v2327, 7
        %v2329 = vsub.s32 6, %v2328
        %v2330 = vrot.slane %v1778, %v2329
        %v2331 = vlaneseq
        %v2332 = vshrl.u32 %v2331, 7
        %v2333 = vsub.s32 7, %v2332
        %v2334 = vrot.slane %v1778, %v2333
        %v2335 = vlaneseq
        %v2336 = vshrl.u32 %v2335, 7
        %v2337 = vsub.s32 0, %v2336
        %v2338 = vrot.slane %v1914, %v2337
        %v2339 = vlaneseq
        %v2340 = vshrl.u32 %v2339, 7
        %v2341 = vsub.s32 1, %v2340
        %v2342 = vrot.slane %v1914, %v2341
        %v2343 = vlaneseq
        %v2344 = vshrl.u32 %v2343, 7
        %v2345 = vsub.s32 2, %v2344
        %v2346 = vrot.slane %v1914, %v2345
        %v2347 = vlaneseq
        %v2348 = vshrl.u32 %v2347, 7
        %v2349 = vsub.s32 3, %v2348
        %v2350 = vrot.slane %v1914, %v2349
        %v2351 = vlaneseq
        %v2352 = vshrl.u32 %v2351, 7
        %v2353 = vsub.s32 4, %v2352
        %v2354 = vrot.slane %v1914, %v2353
        %v2355 = vlaneseq
        %v2356 = vshrl.u32 %v2355, 7
        %v2357 = vsub.s32 5, %v2356
        %v2358 = vrot.slane %v1914, %v2357
        %v2359 = vlaneseq
        %v2360 = vshrl.u32 %v2359, 7
        %v2361 = vsub.s32 6, %v2360
        %v2362 = vrot.slane %v1914, %v2361
        %v2363 = vlaneseq
        %v2364 = vshrl.u32 %v2363, 7
        %v2365 = vsub.s32 7, %v2364
        %v2366 = vrot.slane %v1914, %v2365
        %v2367 = vlaneseq
        %v2368 = vshrl.u32 %v2367, 7
        %v2369 = vsub.s32 0, %v2368
        %v2370 = vrot.slane %v1782, %v2369
        %v2371 = vlaneseq
        %v2372 = vshrl.u32 %v2371, 7
        %v2373 = vsub.s32 1, %v2372
        %v2374 = vrot.slane %v1782, %v2373
        %v2375 = vlaneseq
        %v2376 = vshrl.u32 %v2375, 7
        %v2377 = vsub.s32 2, %v2376
        %v2378 = vrot.slane %v1782, %v2377
        %v2379 = vlaneseq
        %v2380 = vshrl.u32 %v2379, 7
        %v2381 = vsub.s32 3, %v2380
        %v2382 = vrot.slane %v1782, %v2381
        %v2383 = vlaneseq
        %v2384 = vshrl.u32 %v2383, 7
        %v2385 = vsub.s32 4, %v2384
        %v2386 = vrot.slane %v1782, %v2385
        %v2387 = vlaneseq
        %v2388 = vshrl.u32 %v2387, 7
        %v2389 = vsub.s32 5, %v2388
        %v2390 = vrot.slane %v1782, %v2389
        %v2391 = vlaneseq
        %v2392 = vshrl.u32 %v2391, 7
        %v2393 = vsub.s32 6, %v2392
        %v2394 = vrot.slane %v1782, %v2393
        %v2395 = vlaneseq
        %v2396 = vshrl.u32 %v2395, 7
        %v2397 = vsub.s32 7, %v2396
        %v2398 = vrot.slane %v1782, %v2397
        %v2399 = vlaneseq
        %v2400 = vshrl.u32 %v2399, 7
        %v2401 = vsub.s32 0, %v2400
        %v2402 = vrot.slane %v1918, %v2401
        %v2403 = vlaneseq
        %v2404 = vshrl.u32 %v2403, 7
        %v2405 = vsub.s32 1, %v2404
        %v2406 = vrot.slane %v1918, %v2405
        %v2407 = vlaneseq
        %v2408 = vshrl.u32 %v2407, 7
        %v2409 = vsub.s32 2, %v2408
        %v2410 = vrot.slane %v1918, %v2409
        %v2411 = vlaneseq
        %v2412 = vshrl.u32 %v2411, 7
        %v2413 = vsub.s32 3, %v2412
        %v2414 = vrot.slane %v1918, %v2413
        %v2415 = vlaneseq
        %v2416 = vshrl.u32 %v2415, 7
        %v2417 = vsub.s32 4, %v2416
        %v2418 = vrot.slane %v1918, %v2417
        %v2419 = vlaneseq
        %v2420 = vshrl.u32 %v2419, 7
        %v2421 = vsub.s32 5, %v2420
        %v2422 = vrot.slane %v1918, %v2421
        %v2423 = vlaneseq
        %v2424 = vshrl.u32 %v2423, 7
        %v2425 = vsub.s32 6, %v2424
        %v2426 = vrot.slane %v1918, %v2425
        %v2427 = vlaneseq
        %v2428 = vshrl.u32 %v2427, 7
        %v2429 = vsub.s32 7, %v2428
        %v2430 = vrot.slane %v1918, %v2429
        %v2559 = vmul.f32 %v1922, %v241
        %v2560 = vmul.f32 %v1926, %v709
        %v2561 = vmul.f32 %v1930, %v242
        %v2562 = vmul.f32 %v1934, %v710
        %v2563 = vmul.f32 %v1938, %v243
        %v2564 = vmul.f32 %v1942, %v711
        %v2565 = vmul.f32 %v1946, %v244
        %v2566 = vmul.f32 %v1950, %v712
        %v2567 = vmul.f32 %v1954, %v245
        %v2568 = vmul.f32 %v1958, %v713
        %v2569 = vmul.f32 %v1962, %v246
        %v2570 = vmul.f32 %v1966, %v714
        %v2571 = vmul.f32 %v1970, %v247
        %v2572 = vmul.f32 %v1974, %v715
        %v2573 = vmul.f32 %v1978, %v248
        %v2574 = vmul.f32 %v1982, %v716
        %v2575 = vmul.f32 %v1986, %v241
        %v2576 = vmul.f32 %v1990, %v709
        %v2577 = vmul.f32 %v1994, %v242
        %v2578 = vmul.f32 %v1998, %v710
        %v2579 = vmul.f32 %v2002, %v243
        %v2580 = vmul.f32 %v2006, %v711
        %v2581 = vmul.f32 %v2010, %v244
        %v2582 = vmul.f32 %v2014, %v712
        %v2583 = vmul.f32 %v2018, %v245
        %v2584 = vmul.f32 %v2022, %v713
        %v2585 = vmul.f32 %v2026, %v246
        %v2586 = vmul.f32 %v2030, %v714
        %v2587 = vmul.f32 %v2034, %v247
        %v2588 = vmul.f32 %v2038, %v715
        %v2589 = vmul.f32 %v2042, %v248
        %v2590 = vmul.f32 %v2046, %v716
        %v2591 = vmul.f32 %v2050, %v241
        %v2592 = vmul.f32 %v2054, %v709
        %v2593 = vmul.f32 %v2058, %v242
        %v2594 = vmul.f32 %v2062, %v710
        %v2595 = vmul.f32 %v2066, %v243
        %v2596 = vmul.f32 %v2070, %v711
        %v2597 = vmul.f32 %v2074, %v244
        %v2598 = vmul.f32 %v2078, %v712
        %v2599 = vmul.f32 %v2082, %v245
        %v2600 = vmul.f32 %v2086, %v713
        %v2601 = vmul.f32 %v2090, %v246
        %v2602 = vmul.f32 %v2094, %v714
        %v2603 = vmul.f32 %v2098, %v247
        %v2604 = vmul.f32 %v2102, %v715
        %v2605 = vmul.f32 %v2106, %v248
        %v2606 = vmul.f32 %v2110, %v716
        %v2607 = vmul.f32 %v2114, %v241
        %v2608 = vmul.f32 %v2118, %v709
        %v2609 = vmul.f32 %v2122, %v242
        %v2610 = vmul.f32 %v2126, %v710
        %v2611 = vmul.f32 %v2130, %v243
        %v2612 = vmul.f32 %v2134, %v711
        %v2613 = vmul.f32 %v2138, %v244
        %v2614 = vmul.f32 %v2142, %v712
        %v2615 = vmul.f32 %v2146, %v245
        %v2616 = vmul.f32 %v2150, %v713
        %v2617 = vmul.f32 %v2154, %v246
        %v2618 = vmul.f32 %v2158, %v714
        %v2619 = vmul.f32 %v2162, %v247
        %v2620 = vmul.f32 %v2166, %v715
        %v2621 = vmul.f32 %v2170, %v248
        %v2622 = vmul.f32 %v2174, %v716
        %v2623 = vmul.f32 %v2178, %v241
        %v2624 = vmul.f32 %v2182, %v709
        %v2625 = vmul.f32 %v2186, %v242
        %v2626 = vmul.f32 %v2190, %v710
        %v2627 = vmul.f32 %v2194, %v243
        %v2628 = vmul.f32 %v2198, %v711
        %v2629 = vmul.f32 %v2202, %v244
        %v2630 = vmul.f32 %v2206, %v712
        %v2631 = vmul.f32 %v2210, %v245
        %v2632 = vmul.f32 %v2214, %v713
        %v2633 = vmul.f32 %v2218, %v246
        %v2634 = vmul.f32 %v2222, %v714
        %v2635 = vmul.f32 %v2226, %v247
        %v2636 = vmul.f32 %v2230, %v715
        %v2637 = vmul.f32 %v2234, %v248
        %v2638 = vmul.f32 %v2238, %v716
        %v2639 = vmul.f32 %v2242, %v241
        %v2640 = vmul.f32 %v2246, %v709
        %v2641 = vmul.f32 %v2250, %v242
        %v2642 = vmul.f32 %v2254, %v710
        %v2643 = vmul.f32 %v2258, %v243
        %v2644 = vmul.f32 %v2262, %v711
        %v2645 = vmul.f32 %v2266, %v244
        %v2646 = vmul.f32 %v2270, %v712
        %v2647 = vmul.f32 %v2274, %v245
        %v2648 = vmul.f32 %v2278, %v713
        %v2649 = vmul.f32 %v2282, %v246
        %v2650 = vmul.f32 %v2286, %v714
        %v2651 = vmul.f32 %v2290, %v247
        %v2652 = vmul.f32 %v2294, %v715
        %v2653 = vmul.f32 %v2298, %v248
        %v2654 = vmul.f32 %v2302, %v716
        %v2655 = vmul.f32 %v2306, %v241
        %v2656 = vmul.f32 %v2310, %v709
        %v2657 = vmul.f32 %v2314, %v242
        %v2658 = vmul.f32 %v2318, %v710
        %v2659 = vmul.f32 %v2322, %v243
        %v2660 = vmul.f32 %v2326, %v711
        %v2661 = vmul.f32 %v2330, %v244
        %v2662 = vmul.f32 %v2334, %v712
        %v2663 = vmul.f32 %v2338, %v245
        %v2664 = vmul.f32 %v2342, %v713
        %v2665 = vmul.f32 %v2346, %v246
        %v2666 = vmul.f32 %v2350, %v714
        %v2667 = vmul.f32 %v2354, %v247
        %v2668 = vmul.f32 %v2358, %v715
        %v2669 = vmul.f32 %v2362, %v248
        %v2670 = vmul.f32 %v2366, %v716
        %v2671 = vmul.f32 %v2370, %v241
        %v2672 = vmul.f32 %v2374, %v709
        %v2673 = vmul.f32 %v2378, %v242
        %v2674 = vmul.f32 %v2382, %v710
        %v2675 = vmul.f32 %v2386, %v243
        %v2676 = vmul.f32 %v2390, %v711
        %v2677 = vmul.f32 %v2394, %v244
        %v2678 = vmul.f32 %v2398, %v712
        %v2679 = vmul.f32 %v2402, %v245
        %v2680 = vmul.f32 %v2406, %v713
        %v2681 = vmul.f32 %v2410, %v246
        %v2682 = vmul.f32 %v2414, %v714
        %v2683 = vmul.f32 %v2418, %v247
        %v2684 = vmul.f32 %v2422, %v715
        %v2685 = vmul.f32 %v2426, %v248
        %v2686 = vmul.f32 %v2430, %v716
        %v2815 = vcombine.low %v2559, %v2560
        %v2816 = vcombine.low %v2561, %v2562
        %v2817 = vcombine.low %v2563, %v2564
        %v2818 = vcombine.low %v2565, %v2566
        %v2819 = vcombine.low %v2567, %v2568
        %v2820 = vcombine.low %v2569, %v2570
        %v2821 = vcombine.low %v2571, %v2572
        %v2822 = vcombine.low %v2573, %v2574
        %v2823 = vcombine.low %v2575, %v2576
        %v2824 = vcombine.low %v2577, %v2578
        %v2825 = vcombine.low %v2579, %v2580
        %v2826 = vcombine.low %v2581, %v2582
        %v2827 = vcombine.low %v2583, %v2584
        %v2828 = vcombine.low %v2585, %v2586
        %v2829 = vcombine.low %v2587, %v2588
        %v2830 = vcombine.low %v2589, %v2590
        %v2831 = vcombine.low %v2591, %v2592
        %v2832 = vcombine.low %v2593, %v2594
        %v2833 = vcombine.low %v2595, %v2596
        %v2834 = vcombine.low %v2597, %v2598
        %v2835 = vcombine.low %v2599, %v2600
        %v2836 = vcombine.low %v2601, %v2602
        %v2837 = vcombine.low %v2603, %v2604
        %v2838 = vcombine.low %v2605, %v2606
        %v2839 = vcombine.low %v2607, %v2608
        %v2840 = vcombine.low %v2609, %v2610
        %v2841 = vcombine.low %v2611, %v2612
        %v2842 = vcombine.low %v2613, %v2614
        %v2843 = vcombine.low %v2615, %v2616
        %v2844 = vcombine.low %v2617, %v2618
        %v2845 = vcombine.low %v2619, %v2620
        %v2846 = vcombine.low %v2621, %v2622
        %v2847 = vcombine.low %v2623, %v2624
        %v2848 = vcombine.low %v2625, %v2626
        %v2849 = vcombine.low %v2627, %v2628
        %v2850 = vcombine.low %v2629, %v2630
        %v2851 = vcombine.low %v2631, %v2632
        %v2852 = vcombine.low %v2633, %v2634
        %v2853 = vcombine.low %v2635, %v2636
        %v2854 = vcombine.low %v2637, %v2638
        %v2855 = vcombine.low %v2639, %v2640
        %v2856 = vcombine.low %v2641, %v2642
        %v2857 = vcombine.low %v2643, %v2644
        %v2858 = vcombine.low %v2645, %v2646
        %v2859 = vcombine.low %v2647, %v2648
        %v2860 = vcombine.low %v2649, %v2650
        %v2861 = vcombine.low %v2651, %v2652
        %v2862 = vcombine.low %v2653, %v2654
        %v2863 = vcombine.low %v2655, %v2656
        %v2864 = vcombine.low %v2657, %v2658
        %v2865 = vcombine.low %v2659, %v2660
        %v2866 = vcombine.low %v2661, %v2662
        %v2867 = vcombine.low %v2663, %v2664
        %v2868 = vcombine.low %v2665, %v2666
        %v2869 = vcombine.low %v2667, %v2668
        %v2870 = vcombine.low %v2669, %v2670
        %v2871 = vcombine.low %v2671, %v2672
        %v2872 = vcombine.low %v2673, %v2674
        %v2873 = vcombine.low %v2675, %v2676
        %v2874 = vcombine.low %v2677, %v2678
        %v2875 = vcombine.low %v2679, %v2680
        %v2876 = vcombine.low %v2681, %v2682
        %v2877 = vcombine.low %v2683, %v2684
        %v2878 = vcombine.low %v2685, %v2686
        %2880 = vset.pattern.permute.xlu0 0
        %2881 = vperm.xlu0 %2880, %v1630
        %v2882 = vpop.permute.xlu0 %2881
        %v2884 = vcombine.low %v2815, %v2823
        %v2885 = vcombine.high %v2815, %v2823
        %v2886 = vcombine.low %v2816, %v2824
        %v2887 = vcombine.high %v2816, %v2824
        %v2888 = vcombine.low %v2817, %v2825
        %v2889 = vcombine.high %v2817, %v2825
        %v2890 = vcombine.low %v2818, %v2826
        %v2891 = vcombine.high %v2818, %v2826
        %v2892 = vcombine.low %v2819, %v2827
        %v2893 = vcombine.high %v2819, %v2827
        %v2894 = vcombine.low %v2820, %v2828
        %v2895 = vcombine.high %v2820, %v2828
        %v2896 = vcombine.low %v2821, %v2829
        %v2897 = vcombine.high %v2821, %v2829
        %v2898 = vcombine.low %v2822, %v2830
        %v2899 = vcombine.high %v2822, %v2830
        %v2900 = vcombine.low %v2831, %v2839
        %v2901 = vcombine.high %v2831, %v2839
        %v2902 = vcombine.low %v2832, %v2840
        %v2903 = vcombine.high %v2832, %v2840
        %v2904 = vcombine.low %v2833, %v2841
        %v2905 = vcombine.high %v2833, %v2841
        %v2906 = vcombine.low %v2834, %v2842
        %v2907 = vcombine.high %v2834, %v2842
        %v2908 = vcombine.low %v2835, %v2843
        %v2909 = vcombine.high %v2835, %v2843
        %v2910 = vcombine.low %v2836, %v2844
        %v2911 = vcombine.high %v2836, %v2844
        %v2912 = vcombine.low %v2837, %v2845
        %v2913 = vcombine.high %v2837, %v2845
        %v2914 = vcombine.low %v2838, %v2846
        %v2915 = vcombine.high %v2838, %v2846
        %v2916 = vcombine.low %v2847, %v2855
        %v2917 = vcombine.high %v2847, %v2855
        %v2918 = vcombine.low %v2848, %v2856
        %v2919 = vcombine.high %v2848, %v2856
        %v2920 = vcombine.low %v2849, %v2857
        %v2921 = vcombine.high %v2849, %v2857
        %v2922 = vcombine.low %v2850, %v2858
        %v2923 = vcombine.high %v2850, %v2858
        %v2924 = vcombine.low %v2851, %v2859
        %v2925 = vcombine.high %v2851, %v2859
        %v2926 = vcombine.low %v2852, %v2860
        %v2927 = vcombine.high %v2852, %v2860
        %v2928 = vcombine.low %v2853, %v2861
        %v2929 = vcombine.high %v2853, %v2861
        %v2930 = vcombine.low %v2854, %v2862
        %v2931 = vcombine.high %v2854, %v2862
        %v2932 = vcombine.low %v2863, %v2871
        %v2933 = vcombine.high %v2863, %v2871
        %v2934 = vcombine.low %v2864, %v2872
        %v2935 = vcombine.high %v2864, %v2872
        %v2936 = vcombine.low %v2865, %v2873
        %v2937 = vcombine.high %v2865, %v2873
        %v2938 = vcombine.low %v2866, %v2874
        %v2939 = vcombine.high %v2866, %v2874
        %v2940 = vcombine.low %v2867, %v2875
        %v2941 = vcombine.high %v2867, %v2875
        %v2942 = vcombine.low %v2868, %v2876
        %v2943 = vcombine.high %v2868, %v2876
        %v2944 = vcombine.low %v2869, %v2877
        %v2945 = vcombine.high %v2869, %v2877
        %v2946 = vcombine.low %v2870, %v2878
        %v2947 = vcombine.high %v2870, %v2878
        %vm3012 = vcmask 261120
        %v3014 = vsel %vm3012, %v1629, 0
        %3016 = vmatprep.subr.mxu0 0.0
        %3017 = vmatpush1.msra.mxu0 0.0
        %3018 = vmatprep.subr.mxu0 0.0
        %3019 = vmatpush1.msra.mxu0 0.0
        %3020 = vmatprep.subr.mxu0 0.0
        %3021 = vmatpush1.msra.mxu0 0.0
        %3022 = vmatprep.subr.mxu0 0.0
        %3023 = vmatpush1.msra.mxu0 0.0
        %3024 = vmatprep.subr.mxu0 0.0
        %3025 = vmatpush1.msra.mxu0 0.0
        %3026 = vmatprep.subr.mxu0 0.0
        %3027 = vmatpush1.msra.mxu0 0.0
        %3028 = vmatprep.subr.mxu0 0.0
        %3029 = vmatpush1.msra.mxu0 0.0
        %3030 = vmatprep.subr.mxu0 0.0
        %3031 = vmatpush1.msra.mxu0 0.0
        %3032 = vmatprep.subr.mxu0 0.0
        %3033 = vmatpush1.msra.mxu0 0.0
        %3034 = vmatprep.subr.mxu0 0.0
        %3035 = vmatpush1.msra.mxu0 0.0
        %3036 = vmatprep.subr.mxu0 0.0
        %3037 = vmatpush1.msra.mxu0 0.0
        %3038 = vmatprep.subr.mxu0 0.0
        %3039 = vmatpush1.msra.mxu0 0.0
        %3040 = vmatprep.subr.mxu0 %v2933
        %3041 = vmatpush1.msra.mxu0 %v2932
        %3042 = vmatprep.subr.mxu0 %v2917
        %3043 = vmatpush1.msra.mxu0 %v2916
        %3044 = vmatprep.subr.mxu0 %v2901
        %3045 = vmatpush1.msra.mxu0 %v2900
        %3046 = vmatprep.subr.mxu0 %v2885
        %3047 = vmatpush1.msra.mxu0 %v2884
        %3048 = vmatprep.subr.mxu0 0.0
        %3049 = vmatpush2.msra.mxu0 0.0
        %3050 = vmatprep.subr.mxu0 0.0
        %3051 = vmatpush2.msra.mxu0 0.0
        %3052 = vmatprep.subr.mxu0 0.0
        %3053 = vmatpush2.msra.mxu0 0.0
        %3054 = vmatprep.subr.mxu0 0.0
        %3055 = vmatpush2.msra.mxu0 0.0
        %3056 = vmatprep.subr.mxu0 0.0
        %3057 = vmatpush2.msra.mxu0 0.0
        %3058 = vmatprep.subr.mxu0 0.0
        %3059 = vmatpush2.msra.mxu0 0.0
        %3060 = vmatprep.subr.mxu0 0.0
        %3061 = vmatpush2.msra.mxu0 0.0
        %3062 = vmatprep.subr.mxu0 0.0
        %3063 = vmatpush2.msra.mxu0 0.0
        %3064 = vmatprep.subr.mxu0 0.0
        %3065 = vmatpush2.msra.mxu0 0.0
        %3066 = vmatprep.subr.mxu0 0.0
        %3067 = vmatpush2.msra.mxu0 0.0
        %3068 = vmatprep.subr.mxu0 0.0
        %3069 = vmatpush2.msra.mxu0 0.0
        %3070 = vmatprep.subr.mxu0 0.0
        %3071 = vmatpush2.msra.mxu0 0.0
        %3072 = vmatprep.subr.mxu0 0.0
        %3073 = vmatpush2.msra.mxu0 0.0
        %3074 = vmatprep.subr.mxu0 0.0
        %3075 = vmatpush2.msra.mxu0 0.0
        %3076 = vmatprep.subr.mxu0 0.0
        %3077 = vmatpush2.msra.mxu0 0.0
        %3078 = vmatprep.subr.mxu0 0.0
        %3079 = vmatpush2.msra.mxu0 0.0
        %3080 = vmatprep.mubr.f32.mxu0 0.0
        %3081 = vmatmul.mubr.f32.gmra.mxu0 %v3014
        %v3082 = vpop.f32.mrf.mxu0
        %v3083 = vadd.f32 %v2882, %v3082
        %v3084 = vpop.f32.mrf.mxu0
        %v3085 = vadd.f32 %v2882, %v3084
        %3086 = vdwg.mxu0
        %3087 = vmatprep.subr.mxu0 0.0
        %3088 = vmatpush1.msra.mxu0 0.0
        %3089 = vmatprep.subr.mxu0 0.0
        %3090 = vmatpush1.msra.mxu0 0.0
        %3091 = vmatprep.subr.mxu0 0.0
        %3092 = vmatpush1.msra.mxu0 0.0
        %3093 = vmatprep.subr.mxu0 0.0
        %3094 = vmatpush1.msra.mxu0 0.0
        %3095 = vmatprep.subr.mxu0 0.0
        %3096 = vmatpush1.msra.mxu0 0.0
        %3097 = vmatprep.subr.mxu0 0.0
        %3098 = vmatpush1.msra.mxu0 0.0
        %3099 = vmatprep.subr.mxu0 0.0
        %3100 = vmatpush1.msra.mxu0 0.0
        %3101 = vmatprep.subr.mxu0 0.0
        %3102 = vmatpush1.msra.mxu0 0.0
        %3103 = vmatprep.subr.mxu0 0.0
        %3104 = vmatpush1.msra.mxu0 0.0
        %3105 = vmatprep.subr.mxu0 0.0
        %3106 = vmatpush1.msra.mxu0 0.0
        %3107 = vmatprep.subr.mxu0 0.0
        %3108 = vmatpush1.msra.mxu0 0.0
        %3109 = vmatprep.subr.mxu0 0.0
        %3110 = vmatpush1.msra.mxu0 0.0
        %3111 = vmatprep.subr.mxu0 %v2935
        %3112 = vmatpush1.msra.mxu0 %v2934
        %3113 = vmatprep.subr.mxu0 %v2919
        %3114 = vmatpush1.msra.mxu0 %v2918
        %3115 = vmatprep.subr.mxu0 %v2903
        %3116 = vmatpush1.msra.mxu0 %v2902
        %3117 = vmatprep.subr.mxu0 %v2887
        %3118 = vmatpush1.msra.mxu0 %v2886
        %3119 = vmatprep.subr.mxu0 0.0
        %3120 = vmatpush2.msra.mxu0 0.0
        %3121 = vmatprep.subr.mxu0 0.0
        %3122 = vmatpush2.msra.mxu0 0.0
        %3123 = vmatprep.subr.mxu0 0.0
        %3124 = vmatpush2.msra.mxu0 0.0
        %3125 = vmatprep.subr.mxu0 0.0
        %3126 = vmatpush2.msra.mxu0 0.0
        %3127 = vmatprep.subr.mxu0 0.0
        %3128 = vmatpush2.msra.mxu0 0.0
        %3129 = vmatprep.subr.mxu0 0.0
        %3130 = vmatpush2.msra.mxu0 0.0
        %3131 = vmatprep.subr.mxu0 0.0
        %3132 = vmatpush2.msra.mxu0 0.0
        %3133 = vmatprep.subr.mxu0 0.0
        %3134 = vmatpush2.msra.mxu0 0.0
        %3135 = vmatprep.subr.mxu0 0.0
        %3136 = vmatpush2.msra.mxu0 0.0
        %3137 = vmatprep.subr.mxu0 0.0
        %3138 = vmatpush2.msra.mxu0 0.0
        %3139 = vmatprep.subr.mxu0 0.0
        %3140 = vmatpush2.msra.mxu0 0.0
        %3141 = vmatprep.subr.mxu0 0.0
        %3142 = vmatpush2.msra.mxu0 0.0
        %3143 = vmatprep.subr.mxu0 0.0
        %3144 = vmatpush2.msra.mxu0 0.0
        %3145 = vmatprep.subr.mxu0 0.0
        %3146 = vmatpush2.msra.mxu0 0.0
        %3147 = vmatprep.subr.mxu0 0.0
        %3148 = vmatpush2.msra.mxu0 0.0
        %3149 = vmatprep.subr.mxu0 0.0
        %3150 = vmatpush2.msra.mxu0 0.0
        %3151 = vmatprep.mubr.f32.mxu0 0.0
        %3152 = vmatmul.mubr.f32.gmra.mxu0 %v3014
        %v3153 = vpop.f32.mrf.mxu0
        %v3154 = vadd.f32 %v2882, %v3153
        %v3155 = vpop.f32.mrf.mxu0
        %v3156 = vadd.f32 %v2882, %v3155
        %3157 = vdwg.mxu0
        %3158 = vmatprep.subr.mxu0 0.0
        %3159 = vmatpush1.msra.mxu0 0.0
        %3160 = vmatprep.subr.mxu0 0.0
        %3161 = vmatpush1.msra.mxu0 0.0
        %3162 = vmatprep.subr.mxu0 0.0
        %3163 = vmatpush1.msra.mxu0 0.0
        %3164 = vmatprep.subr.mxu0 0.0
        %3165 = vmatpush1.msra.mxu0 0.0
        %3166 = vmatprep.subr.mxu0 0.0
        %3167 = vmatpush1.msra.mxu0 0.0
        %3168 = vmatprep.subr.mxu0 0.0
        %3169 = vmatpush1.msra.mxu0 0.0
        %3170 = vmatprep.subr.mxu0 0.0
        %3171 = vmatpush1.msra.mxu0 0.0
        %3172 = vmatprep.subr.mxu0 0.0
        %3173 = vmatpush1.msra.mxu0 0.0
        %3174 = vmatprep.subr.mxu0 0.0
        %3175 = vmatpush1.msra.mxu0 0.0
        %3176 = vmatprep.subr.mxu0 0.0
        %3177 = vmatpush1.msra.mxu0 0.0
        %3178 = vmatprep.subr.mxu0 0.0
        %3179 = vmatpush1.msra.mxu0 0.0
        %3180 = vmatprep.subr.mxu0 0.0
        %3181 = vmatpush1.msra.mxu0 0.0
        %3182 = vmatprep.subr.mxu0 %v2937
        %3183 = vmatpush1.msra.mxu0 %v2936
        %3184 = vmatprep.subr.mxu0 %v2921
        %3185 = vmatpush1.msra.mxu0 %v2920
        %3186 = vmatprep.subr.mxu0 %v2905
        %3187 = vmatpush1.msra.mxu0 %v2904
        %3188 = vmatprep.subr.mxu0 %v2889
        %3189 = vmatpush1.msra.mxu0 %v2888
        %3190 = vmatprep.subr.mxu0 0.0
        %3191 = vmatpush2.msra.mxu0 0.0
        %3192 = vmatprep.subr.mxu0 0.0
        %3193 = vmatpush2.msra.mxu0 0.0
        %3194 = vmatprep.subr.mxu0 0.0
        %3195 = vmatpush2.msra.mxu0 0.0
        %3196 = vmatprep.subr.mxu0 0.0
        %3197 = vmatpush2.msra.mxu0 0.0
        %3198 = vmatprep.subr.mxu0 0.0
        %3199 = vmatpush2.msra.mxu0 0.0
        %3200 = vmatprep.subr.mxu0 0.0
        %3201 = vmatpush2.msra.mxu0 0.0
        %3202 = vmatprep.subr.mxu0 0.0
        %3203 = vmatpush2.msra.mxu0 0.0
        %3204 = vmatprep.subr.mxu0 0.0
        %3205 = vmatpush2.msra.mxu0 0.0
        %3206 = vmatprep.subr.mxu0 0.0
        %3207 = vmatpush2.msra.mxu0 0.0
        %3208 = vmatprep.subr.mxu0 0.0
        %3209 = vmatpush2.msra.mxu0 0.0
        %3210 = vmatprep.subr.mxu0 0.0
        %3211 = vmatpush2.msra.mxu0 0.0
        %3212 = vmatprep.subr.mxu0 0.0
        %3213 = vmatpush2.msra.mxu0 0.0
        %3214 = vmatprep.subr.mxu0 0.0
        %3215 = vmatpush2.msra.mxu0 0.0
        %3216 = vmatprep.subr.mxu0 0.0
        %3217 = vmatpush2.msra.mxu0 0.0
        %3218 = vmatprep.subr.mxu0 0.0
        %3219 = vmatpush2.msra.mxu0 0.0
        %3220 = vmatprep.subr.mxu0 0.0
        %3221 = vmatpush2.msra.mxu0 0.0
        %3222 = vmatprep.mubr.f32.mxu0 0.0
        %3223 = vmatmul.mubr.f32.gmra.mxu0 %v3014
        %v3224 = vpop.f32.mrf.mxu0
        %v3225 = vadd.f32 %v2882, %v3224
        %v3226 = vpop.f32.mrf.mxu0
        %v3227 = vadd.f32 %v2882, %v3226
        %3228 = vdwg.mxu0
        %3229 = vmatprep.subr.mxu0 0.0
        %3230 = vmatpush1.msra.mxu0 0.0
        %3231 = vmatprep.subr.mxu0 0.0
        %3232 = vmatpush1.msra.mxu0 0.0
        %3233 = vmatprep.subr.mxu0 0.0
        %3234 = vmatpush1.msra.mxu0 0.0
        %3235 = vmatprep.subr.mxu0 0.0
        %3236 = vmatpush1.msra.mxu0 0.0
        %3237 = vmatprep.subr.mxu0 0.0
        %3238 = vmatpush1.msra.mxu0 0.0
        %3239 = vmatprep.subr.mxu0 0.0
        %3240 = vmatpush1.msra.mxu0 0.0
        %3241 = vmatprep.subr.mxu0 0.0
        %3242 = vmatpush1.msra.mxu0 0.0
        %3243 = vmatprep.subr.mxu0 0.0
        %3244 = vmatpush1.msra.mxu0 0.0
        %3245 = vmatprep.subr.mxu0 0.0
        %3246 = vmatpush1.msra.mxu0 0.0
        %3247 = vmatprep.subr.mxu0 0.0
        %3248 = vmatpush1.msra.mxu0 0.0
        %3249 = vmatprep.subr.mxu0 0.0
        %3250 = vmatpush1.msra.mxu0 0.0
        %3251 = vmatprep.subr.mxu0 0.0
        %3252 = vmatpush1.msra.mxu0 0.0
        %3253 = vmatprep.subr.mxu0 %v2939
        %3254 = vmatpush1.msra.mxu0 %v2938
        %3255 = vmatprep.subr.mxu0 %v2923
        %3256 = vmatpush1.msra.mxu0 %v2922
        %3257 = vmatprep.subr.mxu0 %v2907
        %3258 = vmatpush1.msra.mxu0 %v2906
        %3259 = vmatprep.subr.mxu0 %v2891
        %3260 = vmatpush1.msra.mxu0 %v2890
        %3261 = vmatprep.subr.mxu0 0.0
        %3262 = vmatpush2.msra.mxu0 0.0
        %3263 = vmatprep.subr.mxu0 0.0
        %3264 = vmatpush2.msra.mxu0 0.0
        %3265 = vmatprep.subr.mxu0 0.0
        %3266 = vmatpush2.msra.mxu0 0.0
        %3267 = vmatprep.subr.mxu0 0.0
        %3268 = vmatpush2.msra.mxu0 0.0
        %3269 = vmatprep.subr.mxu0 0.0
        %3270 = vmatpush2.msra.mxu0 0.0
        %3271 = vmatprep.subr.mxu0 0.0
        %3272 = vmatpush2.msra.mxu0 0.0
        %3273 = vmatprep.subr.mxu0 0.0
        %3274 = vmatpush2.msra.mxu0 0.0
        %3275 = vmatprep.subr.mxu0 0.0
        %3276 = vmatpush2.msra.mxu0 0.0
        %3277 = vmatprep.subr.mxu0 0.0
        %3278 = vmatpush2.msra.mxu0 0.0
        %3279 = vmatprep.subr.mxu0 0.0
        %3280 = vmatpush2.msra.mxu0 0.0
        %3281 = vmatprep.subr.mxu0 0.0
        %3282 = vmatpush2.msra.mxu0 0.0
        %3283 = vmatprep.subr.mxu0 0.0
        %3284 = vmatpush2.msra.mxu0 0.0
        %3285 = vmatprep.subr.mxu0 0.0
        %3286 = vmatpush2.msra.mxu0 0.0
        %3287 = vmatprep.subr.mxu0 0.0
        %3288 = vmatpush2.msra.mxu0 0.0
        %3289 = vmatprep.subr.mxu0 0.0
        %3290 = vmatpush2.msra.mxu0 0.0
        %3291 = vmatprep.subr.mxu0 0.0
        %3292 = vmatpush2.msra.mxu0 0.0
        %3293 = vmatprep.mubr.f32.mxu0 0.0
        %3294 = vmatmul.mubr.f32.gmra.mxu0 %v3014
        %v3295 = vpop.f32.mrf.mxu0
        %v3296 = vadd.f32 %v2882, %v3295
        %v3297 = vpop.f32.mrf.mxu0
        %v3298 = vadd.f32 %v2882, %v3297
        %3299 = vdwg.mxu0
        %3300 = vmatprep.subr.mxu0 0.0
        %3301 = vmatpush1.msra.mxu0 0.0
        %3302 = vmatprep.subr.mxu0 0.0
        %3303 = vmatpush1.msra.mxu0 0.0
        %3304 = vmatprep.subr.mxu0 0.0
        %3305 = vmatpush1.msra.mxu0 0.0
        %3306 = vmatprep.subr.mxu0 0.0
        %3307 = vmatpush1.msra.mxu0 0.0
        %3308 = vmatprep.subr.mxu0 0.0
        %3309 = vmatpush1.msra.mxu0 0.0
        %3310 = vmatprep.subr.mxu0 0.0
        %3311 = vmatpush1.msra.mxu0 0.0
        %3312 = vmatprep.subr.mxu0 0.0
        %3313 = vmatpush1.msra.mxu0 0.0
        %3314 = vmatprep.subr.mxu0 0.0
        %3315 = vmatpush1.msra.mxu0 0.0
        %3316 = vmatprep.subr.mxu0 0.0
        %3317 = vmatpush1.msra.mxu0 0.0
        %3318 = vmatprep.subr.mxu0 0.0
        %3319 = vmatpush1.msra.mxu0 0.0
        %3320 = vmatprep.subr.mxu0 0.0
        %3321 = vmatpush1.msra.mxu0 0.0
        %3322 = vmatprep.subr.mxu0 0.0
        %3323 = vmatpush1.msra.mxu0 0.0
        %3324 = vmatprep.subr.mxu0 %v2941
        %3325 = vmatpush1.msra.mxu0 %v2940
        %3326 = vmatprep.subr.mxu0 %v2925
        %3327 = vmatpush1.msra.mxu0 %v2924
        %3328 = vmatprep.subr.mxu0 %v2909
        %3329 = vmatpush1.msra.mxu0 %v2908
        %3330 = vmatprep.subr.mxu0 %v2893
        %3331 = vmatpush1.msra.mxu0 %v2892
        %3332 = vmatprep.subr.mxu0 0.0
        %3333 = vmatpush2.msra.mxu0 0.0
        %3334 = vmatprep.subr.mxu0 0.0
        %3335 = vmatpush2.msra.mxu0 0.0
        %3336 = vmatprep.subr.mxu0 0.0
        %3337 = vmatpush2.msra.mxu0 0.0
        %3338 = vmatprep.subr.mxu0 0.0
        %3339 = vmatpush2.msra.mxu0 0.0
        %3340 = vmatprep.subr.mxu0 0.0
        %3341 = vmatpush2.msra.mxu0 0.0
        %3342 = vmatprep.subr.mxu0 0.0
        %3343 = vmatpush2.msra.mxu0 0.0
        %3344 = vmatprep.subr.mxu0 0.0
        %3345 = vmatpush2.msra.mxu0 0.0
        %3346 = vmatprep.subr.mxu0 0.0
        %3347 = vmatpush2.msra.mxu0 0.0
        %3348 = vmatprep.subr.mxu0 0.0
        %3349 = vmatpush2.msra.mxu0 0.0
        %3350 = vmatprep.subr.mxu0 0.0
        %3351 = vmatpush2.msra.mxu0 0.0
        %3352 = vmatprep.subr.mxu0 0.0
        %3353 = vmatpush2.msra.mxu0 0.0
        %3354 = vmatprep.subr.mxu0 0.0
        %3355 = vmatpush2.msra.mxu0 0.0
        %3356 = vmatprep.subr.mxu0 0.0
        %3357 = vmatpush2.msra.mxu0 0.0
        %3358 = vmatprep.subr.mxu0 0.0
        %3359 = vmatpush2.msra.mxu0 0.0
        %3360 = vmatprep.subr.mxu0 0.0
        %3361 = vmatpush2.msra.mxu0 0.0
        %3362 = vmatprep.subr.mxu0 0.0
        %3363 = vmatpush2.msra.mxu0 0.0
        %3364 = vmatprep.mubr.f32.mxu0 0.0
        %3365 = vmatmul.mubr.f32.gmra.mxu0 %v3014
        %v3366 = vpop.f32.mrf.mxu0
        %v3367 = vadd.f32 %v2882, %v3366
        %v3368 = vpop.f32.mrf.mxu0
        %v3369 = vadd.f32 %v2882, %v3368
        %3370 = vdwg.mxu0
        %3371 = vmatprep.subr.mxu0 0.0
        %3372 = vmatpush1.msra.mxu0 0.0
        %3373 = vmatprep.subr.mxu0 0.0
        %3374 = vmatpush1.msra.mxu0 0.0
        %3375 = vmatprep.subr.mxu0 0.0
        %3376 = vmatpush1.msra.mxu0 0.0
        %3377 = vmatprep.subr.mxu0 0.0
        %3378 = vmatpush1.msra.mxu0 0.0
        %3379 = vmatprep.subr.mxu0 0.0
        %3380 = vmatpush1.msra.mxu0 0.0
        %3381 = vmatprep.subr.mxu0 0.0
        %3382 = vmatpush1.msra.mxu0 0.0
        %3383 = vmatprep.subr.mxu0 0.0
        %3384 = vmatpush1.msra.mxu0 0.0
        %3385 = vmatprep.subr.mxu0 0.0
        %3386 = vmatpush1.msra.mxu0 0.0
        %3387 = vmatprep.subr.mxu0 0.0
        %3388 = vmatpush1.msra.mxu0 0.0
        %3389 = vmatprep.subr.mxu0 0.0
        %3390 = vmatpush1.msra.mxu0 0.0
        %3391 = vmatprep.subr.mxu0 0.0
        %3392 = vmatpush1.msra.mxu0 0.0
        %3393 = vmatprep.subr.mxu0 0.0
        %3394 = vmatpush1.msra.mxu0 0.0
        %3395 = vmatprep.subr.mxu0 %v2943
        %3396 = vmatpush1.msra.mxu0 %v2942
        %3397 = vmatprep.subr.mxu0 %v2927
        %3398 = vmatpush1.msra.mxu0 %v2926
        %3399 = vmatprep.subr.mxu0 %v2911
        %3400 = vmatpush1.msra.mxu0 %v2910
        %3401 = vmatprep.subr.mxu0 %v2895
        %3402 = vmatpush1.msra.mxu0 %v2894
        %3403 = vmatprep.subr.mxu0 0.0
        %3404 = vmatpush2.msra.mxu0 0.0
        %3405 = vmatprep.subr.mxu0 0.0
        %3406 = vmatpush2.msra.mxu0 0.0
        %3407 = vmatprep.subr.mxu0 0.0
        %3408 = vmatpush2.msra.mxu0 0.0
        %3409 = vmatprep.subr.mxu0 0.0
        %3410 = vmatpush2.msra.mxu0 0.0
        %3411 = vmatprep.subr.mxu0 0.0
        %3412 = vmatpush2.msra.mxu0 0.0
        %3413 = vmatprep.subr.mxu0 0.0
        %3414 = vmatpush2.msra.mxu0 0.0
        %3415 = vmatprep.subr.mxu0 0.0
        %3416 = vmatpush2.msra.mxu0 0.0
        %3417 = vmatprep.subr.mxu0 0.0
        %3418 = vmatpush2.msra.mxu0 0.0
        %3419 = vmatprep.subr.mxu0 0.0
        %3420 = vmatpush2.msra.mxu0 0.0
        %3421 = vmatprep.subr.mxu0 0.0
        %3422 = vmatpush2.msra.mxu0 0.0
        %3423 = vmatprep.subr.mxu0 0.0
        %3424 = vmatpush2.msra.mxu0 0.0
        %3425 = vmatprep.subr.mxu0 0.0
        %3426 = vmatpush2.msra.mxu0 0.0
        %3427 = vmatprep.subr.mxu0 0.0
        %3428 = vmatpush2.msra.mxu0 0.0
        %3429 = vmatprep.subr.mxu0 0.0
        %3430 = vmatpush2.msra.mxu0 0.0
        %3431 = vmatprep.subr.mxu0 0.0
        %3432 = vmatpush2.msra.mxu0 0.0
        %3433 = vmatprep.subr.mxu0 0.0
        %3434 = vmatpush2.msra.mxu0 0.0
        %3435 = vmatprep.mubr.f32.mxu0 0.0
        %3436 = vmatmul.mubr.f32.gmra.mxu0 %v3014
        %v3437 = vpop.f32.mrf.mxu0
        %v3438 = vadd.f32 %v2882, %v3437
        %v3439 = vpop.f32.mrf.mxu0
        %v3440 = vadd.f32 %v2882, %v3439
        %3441 = vdwg.mxu0
        %3442 = vmatprep.subr.mxu0 0.0
        %3443 = vmatpush1.msra.mxu0 0.0
        %3444 = vmatprep.subr.mxu0 0.0
        %3445 = vmatpush1.msra.mxu0 0.0
        %3446 = vmatprep.subr.mxu0 0.0
        %3447 = vmatpush1.msra.mxu0 0.0
        %3448 = vmatprep.subr.mxu0 0.0
        %3449 = vmatpush1.msra.mxu0 0.0
        %3450 = vmatprep.subr.mxu0 0.0
        %3451 = vmatpush1.msra.mxu0 0.0
        %3452 = vmatprep.subr.mxu0 0.0
        %3453 = vmatpush1.msra.mxu0 0.0
        %3454 = vmatprep.subr.mxu0 0.0
        %3455 = vmatpush1.msra.mxu0 0.0
        %3456 = vmatprep.subr.mxu0 0.0
        %3457 = vmatpush1.msra.mxu0 0.0
        %3458 = vmatprep.subr.mxu0 0.0
        %3459 = vmatpush1.msra.mxu0 0.0
        %3460 = vmatprep.subr.mxu0 0.0
        %3461 = vmatpush1.msra.mxu0 0.0
        %3462 = vmatprep.subr.mxu0 0.0
        %3463 = vmatpush1.msra.mxu0 0.0
        %3464 = vmatprep.subr.mxu0 0.0
        %3465 = vmatpush1.msra.mxu0 0.0
        %3466 = vmatprep.subr.mxu0 %v2945
        %3467 = vmatpush1.msra.mxu0 %v2944
        %3468 = vmatprep.subr.mxu0 %v2929
        %3469 = vmatpush1.msra.mxu0 %v2928
        %3470 = vmatprep.subr.mxu0 %v2913
        %3471 = vmatpush1.msra.mxu0 %v2912
        %3472 = vmatprep.subr.mxu0 %v2897
        %3473 = vmatpush1.msra.mxu0 %v2896
        %3474 = vmatprep.subr.mxu0 0.0
        %3475 = vmatpush2.msra.mxu0 0.0
        %3476 = vmatprep.subr.mxu0 0.0
        %3477 = vmatpush2.msra.mxu0 0.0
        %3478 = vmatprep.subr.mxu0 0.0
        %3479 = vmatpush2.msra.mxu0 0.0
        %3480 = vmatprep.subr.mxu0 0.0
        %3481 = vmatpush2.msra.mxu0 0.0
        %3482 = vmatprep.subr.mxu0 0.0
        %3483 = vmatpush2.msra.mxu0 0.0
        %3484 = vmatprep.subr.mxu0 0.0
        %3485 = vmatpush2.msra.mxu0 0.0
        %3486 = vmatprep.subr.mxu0 0.0
        %3487 = vmatpush2.msra.mxu0 0.0
        %3488 = vmatprep.subr.mxu0 0.0
        %3489 = vmatpush2.msra.mxu0 0.0
        %3490 = vmatprep.subr.mxu0 0.0
        %3491 = vmatpush2.msra.mxu0 0.0
        %3492 = vmatprep.subr.mxu0 0.0
        %3493 = vmatpush2.msra.mxu0 0.0
        %3494 = vmatprep.subr.mxu0 0.0
        %3495 = vmatpush2.msra.mxu0 0.0
        %3496 = vmatprep.subr.mxu0 0.0
        %3497 = vmatpush2.msra.mxu0 0.0
        %3498 = vmatprep.subr.mxu0 0.0
        %3499 = vmatpush2.msra.mxu0 0.0
        %3500 = vmatprep.subr.mxu0 0.0
        %3501 = vmatpush2.msra.mxu0 0.0
        %3502 = vmatprep.subr.mxu0 0.0
        %3503 = vmatpush2.msra.mxu0 0.0
        %3504 = vmatprep.subr.mxu0 0.0
        %3505 = vmatpush2.msra.mxu0 0.0
        %3506 = vmatprep.mubr.f32.mxu0 0.0
        %3507 = vmatmul.mubr.f32.gmra.mxu0 %v3014
        %v3508 = vpop.f32.mrf.mxu0
        %v3509 = vadd.f32 %v2882, %v3508
        %v3510 = vpop.f32.mrf.mxu0
        %v3511 = vadd.f32 %v2882, %v3510
        %3512 = vdwg.mxu0
        %3513 = vmatprep.subr.mxu0 0.0
        %3514 = vmatpush1.msra.mxu0 0.0
        %3515 = vmatprep.subr.mxu0 0.0
        %3516 = vmatpush1.msra.mxu0 0.0
        %3517 = vmatprep.subr.mxu0 0.0
        %3518 = vmatpush1.msra.mxu0 0.0
        %3519 = vmatprep.subr.mxu0 0.0
        %3520 = vmatpush1.msra.mxu0 0.0
        %3521 = vmatprep.subr.mxu0 0.0
        %3522 = vmatpush1.msra.mxu0 0.0
        %3523 = vmatprep.subr.mxu0 0.0
        %3524 = vmatpush1.msra.mxu0 0.0
        %3525 = vmatprep.subr.mxu0 0.0
        %3526 = vmatpush1.msra.mxu0 0.0
        %3527 = vmatprep.subr.mxu0 0.0
        %3528 = vmatpush1.msra.mxu0 0.0
        %3529 = vmatprep.subr.mxu0 0.0
        %3530 = vmatpush1.msra.mxu0 0.0
        %3531 = vmatprep.subr.mxu0 0.0
        %3532 = vmatpush1.msra.mxu0 0.0
        %3533 = vmatprep.subr.mxu0 0.0
        %3534 = vmatpush1.msra.mxu0 0.0
        %3535 = vmatprep.subr.mxu0 0.0
        %3536 = vmatpush1.msra.mxu0 0.0
        %3537 = vmatprep.subr.mxu0 %v2947
        %3538 = vmatpush1.msra.mxu0 %v2946
        %3539 = vmatprep.subr.mxu0 %v2931
        %3540 = vmatpush1.msra.mxu0 %v2930
        %3541 = vmatprep.subr.mxu0 %v2915
        %3542 = vmatpush1.msra.mxu0 %v2914
        %3543 = vmatprep.subr.mxu0 %v2899
        %3544 = vmatpush1.msra.mxu0 %v2898
        %3545 = vmatprep.subr.mxu0 0.0
        %3546 = vmatpush2.msra.mxu0 0.0
        %3547 = vmatprep.subr.mxu0 0.0
        %3548 = vmatpush2.msra.mxu0 0.0
        %3549 = vmatprep.subr.mxu0 0.0
        %3550 = vmatpush2.msra.mxu0 0.0
        %3551 = vmatprep.subr.mxu0 0.0
        %3552 = vmatpush2.msra.mxu0 0.0
        %3553 = vmatprep.subr.mxu0 0.0
        %3554 = vmatpush2.msra.mxu0 0.0
        %3555 = vmatprep.subr.mxu0 0.0
        %3556 = vmatpush2.msra.mxu0 0.0
        %3557 = vmatprep.subr.mxu0 0.0
        %3558 = vmatpush2.msra.mxu0 0.0
        %3559 = vmatprep.subr.mxu0 0.0
        %3560 = vmatpush2.msra.mxu0 0.0
        %3561 = vmatprep.subr.mxu0 0.0
        %3562 = vmatpush2.msra.mxu0 0.0
        %3563 = vmatprep.subr.mxu0 0.0
        %3564 = vmatpush2.msra.mxu0 0.0
        %3565 = vmatprep.subr.mxu0 0.0
        %3566 = vmatpush2.msra.mxu0 0.0
        %3567 = vmatprep.subr.mxu0 0.0
        %3568 = vmatpush2.msra.mxu0 0.0
        %3569 = vmatprep.subr.mxu0 0.0
        %3570 = vmatpush2.msra.mxu0 0.0
        %3571 = vmatprep.subr.mxu0 0.0
        %3572 = vmatpush2.msra.mxu0 0.0
        %3573 = vmatprep.subr.mxu0 0.0
        %3574 = vmatpush2.msra.mxu0 0.0
        %3575 = vmatprep.subr.mxu0 0.0
        %3576 = vmatpush2.msra.mxu0 0.0
        %3577 = vmatprep.mubr.f32.mxu0 0.0
        %3578 = vmatmul.mubr.f32.gmra.mxu0 %v3014
        %v3579 = vpop.f32.mrf.mxu0
        %v3580 = vadd.f32 %v2882, %v3579
        %v3581 = vpop.f32.mrf.mxu0
        %v3582 = vadd.f32 %v2882, %v3581
        %3583 = vdwg.mxu0
        %v3584 = vmax.f32 %v3083, 0.0
        %v3585 = vmax.f32 %v3085, 0.0
        %v3586 = vmax.f32 %v3154, 0.0
        %v3587 = vmax.f32 %v3156, 0.0
        %v3588 = vmax.f32 %v3225, 0.0
        %v3589 = vmax.f32 %v3227, 0.0
        %v3590 = vmax.f32 %v3296, 0.0
        %v3591 = vmax.f32 %v3298, 0.0
        %v3592 = vmax.f32 %v3367, 0.0
        %v3593 = vmax.f32 %v3369, 0.0
        %v3594 = vmax.f32 %v3438, 0.0
        %v3595 = vmax.f32 %v3440, 0.0
        %v3596 = vmax.f32 %v3509, 0.0
        %v3597 = vmax.f32 %v3511, 0.0
        %v3598 = vmax.f32 %v3580, 0.0
        %v3599 = vmax.f32 %v3582, 0.0
        %v3600 = vadd.f32 %v3584, %v3585
        %v3601 = vadd.f32 %v3600, %v3586
        %v3602 = vadd.f32 %v3601, %v3587
        %v3603 = vadd.f32 %v3602, %v3588
        %v3604 = vadd.f32 %v3603, %v3589
        %v3605 = vadd.f32 %v3604, %v3590
        %v3606 = vadd.f32 %v3605, %v3591
        %v3607 = vadd.f32 %v3606, %v3592
        %v3608 = vadd.f32 %v3607, %v3593
        %v3609 = vadd.f32 %v3608, %v3594
        %v3610 = vadd.f32 %v3609, %v3595
        %v3611 = vadd.f32 %v3610, %v3596
        %v3612 = vadd.f32 %v3611, %v3597
        %v3613 = vadd.f32 %v3612, %v3598
        %v3614 = vadd.f32 %v3613, %v3599
        %3615 = vst [vmem:[%s240] sm:$0xff] %v1628
        %3616 = vst [vmem:[%s240 + $0x8] sm:$0xff] %v3614
        %s3617 = sand.u32 %s140, 1
        %s3618 = scalar_lea.sflag [#allocation4], %s3617
        %s3619 = sand.u32 %s140, 1
        %s3620 = smul.addr %s3619, 16
        %s3621 = scalar_lea.vmem [#allocation5], %s3620
        // Predicated region
        $region45: #{tpu_custom_call.1} parent=39 // pred_check
          %p3622 = pneg %p150
        $region46: #{tpu_custom_call.1} parent=39 // pred_check_branch
          %3624 = sbr.rel (%p3622) target = $region48
        $region47: #{tpu_custom_call.1} parent=39 // pred_region
          %s3626 = ssub.s32 256, 256
          %3627 = vsyncadd %s3618, %s3626
          %s3628 = smul.addr %s22, 128
          %s3629 = scalar_lea.hbm %s5, %s3628
          %s3630 = sshll.u32 %s3621, 4
          %s3631 = int_to_ptr.vmem [resolvable:$true] %s3630
          %3636 = dma.vmem_to_hbm [thread:$0]  %s3631, 256, %s3629, %s3618, 128, 256, 8
        $region48: #{tpu_custom_call.1} parent=39 // pred_fallthru
          _
      $region40: #{tpu_custom_call.1} parent=5 // pred_fallthru
        _
      %p3637 = scmp.le.s32.totalorder 2, %s17
      // Predicated region
      $region49: #{tpu_custom_call.1} parent=5 // pred_check
        %p3638 = pneg %p3637
      $region50: #{tpu_custom_call.1} parent=5 // pred_check_branch
        %3640 = sbr.rel (%p3638) target = $region52
      $region51: #{tpu_custom_call.1} parent=5 // pred_region
        %s3641 = ssub.s32 %s17, 2
        // Predicated region
        $region53: #{tpu_custom_call.1} parent=51 // pred_check
          %p3642 = pneg %p156
        $region54: #{tpu_custom_call.1} parent=51 // pred_check_branch
          %3644 = sbr.rel (%p3642) target = $region56
        $region55: #{tpu_custom_call.1} parent=51 // pred_region
          %s3645 = sand.u32 %s141, 1
          %s3646 = scalar_lea.sflag [#allocation4], %s3645
          %s3647 = sand.u32 %s141, 1
          %s3648 = smul.addr %s3647, 16
          %s3649 = scalar_lea.vmem [#allocation5], %s3648
          %3650 = dma.done %s3646, 256
        $region56: #{tpu_custom_call.1} parent=51 // pred_fallthru
          _
      $region52: #{tpu_custom_call.1} parent=5 // pred_fallthru
        _
    $region6: #{tpu_custom_call.1} parent=1 // loop_footer
      %s21 = sadd.s32 1, %s17
    $region7: #{tpu_custom_call.1} parent=1 // loop_footer_branch
      %16 = sbr.rel target = $region3
    $region8: #{tpu_custom_call.1} parent=1 // loop_exit
      _
    %3651 = vsyncpa [#allocation3], 1
    %s3652 = scalar_lea.sflag [#allocation3], 1
    %3653 = vsyncpa %s3652, 1
    %3654 = vsyncpa [#allocation4], 1
    %s3655 = scalar_lea.sflag [#allocation4], 1
    %3656 = vsyncpa %s3655, 1

</llo_original>
